<compile_context>
chip_gen: v6e
topology: v6e:2x2x1
jax: 0.10.0
libtpu: 0.0.40
codegen_flags: <defaults>
</compile_context>

<pallas_src>
import functools

import jax
import jax.numpy as jnp
from jax.experimental import pallas as pl
from jax.experimental.pallas import tpu as pltpu

NUM_LAYERS = 5          # fc1, fc2, fc3, fc4, out
PADDED_DIM = 128        # every layer's in/out dim zero-padded to 128
TILE_B = 256            # batch tile (lanes); multiple of 128 -> fine on v5e too


def fullnet_kernel(w_ref, b_ref, x_ref, o_ref):
    # w_ref: (5, 128, 128)  zero-padded (out, in) weights, resident in VMEM
    # b_ref: (5, 128, 1)    zero-padded biases (broadcast along lane/batch axis)
    # x_ref: (128, TILE_B)  features-on-sublanes, batch-on-lanes (zero-padded)
    # o_ref: (1, TILE_B)    lane-dense sigmoid output (row 0 of final layer)
    h = x_ref[...]                                        # (128, TILE_B) f32

    # Hidden layers 1..4: relu(W @ h + b). Padded rows/cols are zero, so the
    # padded output rows stay exactly 0 and feed zeros into the next layer.
    for l in range(NUM_LAYERS - 1):
        z = jnp.dot(w_ref[l], h, preferred_element_type=jnp.float32) + b_ref[l]
        h = jnp.maximum(z, 0.0)

    # Output layer (real out_features == 1 -> only row 0 is meaningful).
    z = jnp.dot(w_ref[NUM_LAYERS - 1], h,
                preferred_element_type=jnp.float32) + b_ref[NUM_LAYERS - 1]
    z0 = z[0:1, :]                                        # (1, TILE_B)
    # sigmoid(z) = 1 / (1 + exp(-z)); exp + approx reciprocal both run on the EUP.
    o_ref[...] = pl.reciprocal(1.0 + jnp.exp(-z0), approx=True)


def pack_params(params):
    """Pack [(w(out,in), b(out,)), ...] into zero-padded (5,128,128)/(5,128,1) slabs."""
    w_slab = jnp.zeros((NUM_LAYERS, PADDED_DIM, PADDED_DIM), jnp.float32)
    b_slab = jnp.zeros((NUM_LAYERS, PADDED_DIM, 1), jnp.float32)
    for l, (w, b) in enumerate(params):
        out_f, in_f = w.shape
        w_slab = w_slab.at[l, :out_f, :in_f].set(w.astype(jnp.float32))
        b_slab = b_slab.at[l, :out_f, 0].set(b.astype(jnp.float32))
    return w_slab, b_slab


@functools.partial(jax.jit, static_argnames=("tile_b",))
def fullnet_forward(x, w_slab, b_slab, *, tile_b=TILE_B):
    """x: (B, 100) f32 -> (B, 1) f32 sigmoid output."""
    B, in_f = x.shape
    n_tiles = pl.cdiv(B, tile_b)
    b_pad = n_tiles * tile_b

    # Transpose so batch occupies the lane axis; pad features 100 -> 128 and
    # batch -> multiple of tile_b (zero padding is numerically inert / discarded).
    xt = jnp.zeros((PADDED_DIM, b_pad), jnp.float32).at[:in_f, :B].set(x.T)

    cost = pl.CostEstimate(
        flops=2 * b_pad * NUM_LAYERS * PADDED_DIM * PADDED_DIM,
        transcendentals=2 * b_pad,
        bytes_accessed=4 * (PADDED_DIM * b_pad
                            + NUM_LAYERS * PADDED_DIM * PADDED_DIM
                            + NUM_LAYERS * PADDED_DIM
                            + b_pad),
    )

    out = pl.pallas_call(
        fullnet_kernel,
        out_shape=jax.ShapeDtypeStruct((1, b_pad), jnp.float32),
        grid_spec=pltpu.PrefetchScalarGridSpec(
            num_scalar_prefetch=0,
            grid=(n_tiles,),
            in_specs=[
                # Weight / bias slabs: constant index_map -> resident in VMEM.
                pl.BlockSpec((NUM_LAYERS, PADDED_DIM, PADDED_DIM),
                             lambda i: (0, 0, 0)),
                pl.BlockSpec((NUM_LAYERS, PADDED_DIM, 1),
                             lambda i: (0, 0, 0)),
                # Activations: tiled along the batch (lane) axis -> pipelined DMA.
                pl.BlockSpec((PADDED_DIM, tile_b), lambda i: (0, i)),
            ],
            out_specs=pl.BlockSpec((1, tile_b), lambda i: (0, i)),
        ),
        compiler_params=pltpu.CompilerParams(
            dimension_semantics=("parallel",),
        ),
        cost_estimate=cost,
    )(w_slab, b_slab, xt)

    return out[0, :B].reshape(B, 1)


def init_params(key):
    """PyTorch nn.Linear-style init: W (out,in), b (out,), U(-1/sqrt(fan_in), 1/sqrt(fan_in))."""
    dims = [(100, 128), (128, 64), (64, 32), (32, 16), (16, 1)]
    params = []
    for (fan_in, fan_out) in dims:
        key, kw, kb = jax.random.split(key, 3)
        bound = 1.0 / (fan_in ** 0.5)
        w = jax.random.uniform(kw, (fan_out, fan_in), jnp.float32, -bound, bound)
        b = jax.random.uniform(kb, (fan_out,), jnp.float32, -bound, bound)
        params.append((w, b))
    return params


def reference_forward(x, params):
    h = x
    for (w, b) in params[:-1]:
        h = jnp.maximum(h @ w.T + b, 0.0)
    w, b = params[-1]
    return jax.nn.sigmoid(h @ w.T + b)


if __name__ == "__main__":
    key = jax.random.PRNGKey(0)
    key, kx = jax.random.split(key)

    B = 8
    x = jax.random.normal(kx, (B, 100), jnp.float32)
    params = init_params(key)
    w_slab, b_slab = pack_params(params)

    out = fullnet_forward(x, w_slab, b_slab)
    out = jax.block_until_ready(out)

    ref = reference_forward(x, params)
    assert out.shape == (B, 1), out.shape
    # Slightly relaxed tolerance: the sigmoid uses the EUP approximate reciprocal.
    assert jnp.allclose(out, ref, atol=1e-3, rtol=1e-3), "mismatch vs JAX reference"

    print("KERNEL_OK")
</pallas_src>

<mosaic_0001>
module attributes {stable_mosaic.version = 11 : i64} {
  func.func @fullnet_kernel(%arg0: i32, %arg1: memref<5x128x128xf32, #tpu.memory_space<vmem>>, %arg2: memref<5x128x1xf32, #tpu.memory_space<vmem>>, %arg3: memref<128x256xf32, #tpu.memory_space<vmem>>, %arg4: memref<1x256xf32, #tpu.memory_space<vmem>>) attributes {dimension_semantics = [#tpu.dimension_semantics<parallel>], iteration_bounds = array<i64: 1>, scalar_prefetch = 0 : i64, scratch_operands = 0 : i64, tpu.core_type = #tpu.core_type<tc>, window_params = [{pipeline_mode = #tpu.pipeline_mode<synchronous>, transform_indices = @transform_0, window_bounds = array<i64: 5, 128, 128>}, {pipeline_mode = #tpu.pipeline_mode<synchronous>, transform_indices = @transform_1, window_bounds = array<i64: 5, 128, 1>}, {transform_indices = @transform_2, window_bounds = array<i64: 128, 256>}, {transform_indices = @transform_3, window_bounds = array<i64: 1, 256>}]} {
    %c0 = arith.constant 0 : index
    %c0_0 = arith.constant 0 : index
    %0 = vector.load %arg3[%c0, %c0_0] : memref<128x256xf32, #tpu.memory_space<vmem>>, vector<128x256xf32>
    %c0_1 = arith.constant 0 : index
    %c0_2 = arith.constant 0 : index
    %c0_3 = arith.constant 0 : index
    %1 = vector.load %arg1[%c0_1, %c0_2, %c0_3] : memref<5x128x128xf32, #tpu.memory_space<vmem>>, vector<1x128x128xf32>
    %2 = vector.shape_cast %1 : vector<1x128x128xf32> to vector<128x128xf32>
    %cst = arith.constant dense<0.000000e+00> : vector<128x256xf32>
    %3 = tpu.matmul %2, %0, %cst {dimension_numbers = #tpu.dot_dimension_numbers<[1], [0], [0], [1], [0, 0, 1, 1], [], []>} : vector<128x128xf32>, vector<128x256xf32>, vector<128x256xf32> -> vector<128x256xf32>
    %c0_4 = arith.constant 0 : index
    %c0_5 = arith.constant 0 : index
    %c0_6 = arith.constant 0 : index
    %4 = vector.load %arg2[%c0_4, %c0_5, %c0_6] : memref<5x128x1xf32, #tpu.memory_space<vmem>>, vector<1x128x1xf32>
    %5 = vector.shape_cast %4 : vector<1x128x1xf32> to vector<128x1xf32>
    %6 = vector.broadcast %5 : vector<128x1xf32> to vector<128x256xf32>
    %7 = arith.addf %3, %6 : vector<128x256xf32>
    %cst_7 = arith.constant 0.000000e+00 : f32
    %8 = vector.broadcast %cst_7 : f32 to vector<128x256xf32>
    %9 = arith.maximumf %7, %8 : vector<128x256xf32>
    %c1 = arith.constant 1 : index
    %c0_8 = arith.constant 0 : index
    %c0_9 = arith.constant 0 : index
    %10 = vector.load %arg1[%c1, %c0_8, %c0_9] : memref<5x128x128xf32, #tpu.memory_space<vmem>>, vector<1x128x128xf32>
    %11 = vector.shape_cast %10 : vector<1x128x128xf32> to vector<128x128xf32>
    %cst_10 = arith.constant dense<0.000000e+00> : vector<128x256xf32>
    %12 = tpu.matmul %11, %9, %cst_10 {dimension_numbers = #tpu.dot_dimension_numbers<[1], [0], [0], [1], [0, 0, 1, 1], [], []>} : vector<128x128xf32>, vector<128x256xf32>, vector<128x256xf32> -> vector<128x256xf32>
    %c1_11 = arith.constant 1 : index
    %c0_12 = arith.constant 0 : index
    %c0_13 = arith.constant 0 : index
    %13 = vector.load %arg2[%c1_11, %c0_12, %c0_13] : memref<5x128x1xf32, #tpu.memory_space<vmem>>, vector<1x128x1xf32>
    %14 = vector.shape_cast %13 : vector<1x128x1xf32> to vector<128x1xf32>
    %15 = vector.broadcast %14 : vector<128x1xf32> to vector<128x256xf32>
    %16 = arith.addf %12, %15 : vector<128x256xf32>
    %cst_14 = arith.constant 0.000000e+00 : f32
    %17 = vector.broadcast %cst_14 : f32 to vector<128x256xf32>
    %18 = arith.maximumf %16, %17 : vector<128x256xf32>
    %c2 = arith.constant 2 : index
    %c0_15 = arith.constant 0 : index
    %c0_16 = arith.constant 0 : index
    %19 = vector.load %arg1[%c2, %c0_15, %c0_16] : memref<5x128x128xf32, #tpu.memory_space<vmem>>, vector<1x128x128xf32>
    %20 = vector.shape_cast %19 : vector<1x128x128xf32> to vector<128x128xf32>
    %cst_17 = arith.constant dense<0.000000e+00> : vector<128x256xf32>
    %21 = tpu.matmul %20, %18, %cst_17 {dimension_numbers = #tpu.dot_dimension_numbers<[1], [0], [0], [1], [0, 0, 1, 1], [], []>} : vector<128x128xf32>, vector<128x256xf32>, vector<128x256xf32> -> vector<128x256xf32>
    %c2_18 = arith.constant 2 : index
    %c0_19 = arith.constant 0 : index
    %c0_20 = arith.constant 0 : index
    %22 = vector.load %arg2[%c2_18, %c0_19, %c0_20] : memref<5x128x1xf32, #tpu.memory_space<vmem>>, vector<1x128x1xf32>
    %23 = vector.shape_cast %22 : vector<1x128x1xf32> to vector<128x1xf32>
    %24 = vector.broadcast %23 : vector<128x1xf32> to vector<128x256xf32>
    %25 = arith.addf %21, %24 : vector<128x256xf32>
    %cst_21 = arith.constant 0.000000e+00 : f32
    %26 = vector.broadcast %cst_21 : f32 to vector<128x256xf32>
    %27 = arith.maximumf %25, %26 : vector<128x256xf32>
    %c3 = arith.constant 3 : index
    %c0_22 = arith.constant 0 : index
    %c0_23 = arith.constant 0 : index
    %28 = vector.load %arg1[%c3, %c0_22, %c0_23] : memref<5x128x128xf32, #tpu.memory_space<vmem>>, vector<1x128x128xf32>
    %29 = vector.shape_cast %28 : vector<1x128x128xf32> to vector<128x128xf32>
    %cst_24 = arith.constant dense<0.000000e+00> : vector<128x256xf32>
    %30 = tpu.matmul %29, %27, %cst_24 {dimension_numbers = #tpu.dot_dimension_numbers<[1], [0], [0], [1], [0, 0, 1, 1], [], []>} : vector<128x128xf32>, vector<128x256xf32>, vector<128x256xf32> -> vector<128x256xf32>
    %c3_25 = arith.constant 3 : index
    %c0_26 = arith.constant 0 : index
    %c0_27 = arith.constant 0 : index
    %31 = vector.load %arg2[%c3_25, %c0_26, %c0_27] : memref<5x128x1xf32, #tpu.memory_space<vmem>>, vector<1x128x1xf32>
    %32 = vector.shape_cast %31 : vector<1x128x1xf32> to vector<128x1xf32>
    %33 = vector.broadcast %32 : vector<128x1xf32> to vector<128x256xf32>
    %34 = arith.addf %30, %33 : vector<128x256xf32>
    %cst_28 = arith.constant 0.000000e+00 : f32
    %35 = vector.broadcast %cst_28 : f32 to vector<128x256xf32>
    %36 = arith.maximumf %34, %35 : vector<128x256xf32>
    %c4 = arith.constant 4 : index
    %c0_29 = arith.constant 0 : index
    %c0_30 = arith.constant 0 : index
    %37 = vector.load %arg1[%c4, %c0_29, %c0_30] : memref<5x128x128xf32, #tpu.memory_space<vmem>>, vector<1x128x128xf32>
    %38 = vector.shape_cast %37 : vector<1x128x128xf32> to vector<128x128xf32>
    %cst_31 = arith.constant dense<0.000000e+00> : vector<128x256xf32>
    %39 = tpu.matmul %38, %36, %cst_31 {dimension_numbers = #tpu.dot_dimension_numbers<[1], [0], [0], [1], [0, 0, 1, 1], [], []>} : vector<128x128xf32>, vector<128x256xf32>, vector<128x256xf32> -> vector<128x256xf32>
    %c4_32 = arith.constant 4 : index
    %c0_33 = arith.constant 0 : index
    %c0_34 = arith.constant 0 : index
    %40 = vector.load %arg2[%c4_32, %c0_33, %c0_34] : memref<5x128x1xf32, #tpu.memory_space<vmem>>, vector<1x128x1xf32>
    %41 = vector.shape_cast %40 : vector<1x128x1xf32> to vector<128x1xf32>
    %42 = vector.broadcast %41 : vector<128x1xf32> to vector<128x256xf32>
    %43 = arith.addf %39, %42 : vector<128x256xf32>
    %44 = vector.extract_strided_slice %43 {offsets = [0, 0], sizes = [1, 256], strides = [1, 1]} : vector<128x256xf32> to vector<1x256xf32>
    %cst_35 = arith.constant 0.000000e+00 : f32
    %45 = vector.broadcast %cst_35 : f32 to vector<1x256xf32>
    %46 = arith.subf %45, %44 : vector<1x256xf32>
    %47 = math.exp %46 : vector<1x256xf32>
    %cst_36 = arith.constant 1.000000e+00 : f32
    %48 = vector.broadcast %cst_36 : f32 to vector<1x256xf32>
    %49 = arith.addf %48, %47 : vector<1x256xf32>
    %50 = tpu.reciprocal %49 {approx = true} : vector<1x256xf32> -> vector<1x256xf32>
    %c0_37 = arith.constant 0 : index
    %c0_38 = arith.constant 0 : index
    %51 = vector.load %arg4[%c0_37, %c0_38] : memref<1x256xf32, #tpu.memory_space<vmem>>, vector<1x256xf32>
    tpu.vector_store %arg4[%c0_37, %c0_38], %50 {strides = array<i32>} : memref<1x256xf32, #tpu.memory_space<vmem>>, vector<1x256xf32>,
    return
  }
  func.func @transform_0(%arg0: i32) -> (i32, i32, i32) {
    %c0_i32 = arith.constant 0 : i32
    %c0_i32_0 = arith.constant 0 : i32
    %c0_i32_1 = arith.constant 0 : i32
    %c0_i32_2 = arith.constant 0 : i32
    return %c0_i32, %c0_i32_0, %c0_i32_1 : i32, i32, i32
  }
  func.func @transform_1(%arg0: i32) -> (i32, i32, i32) {
    %c0_i32 = arith.constant 0 : i32
    %c0_i32_0 = arith.constant 0 : i32
    %c0_i32_1 = arith.constant 0 : i32
    %c0_i32_2 = arith.constant 0 : i32
    return %c0_i32, %c0_i32_0, %c0_i32_1 : i32, i32, i32
  }
  func.func @transform_2(%arg0: i32) -> (i32, i32) {
    %c0_i32 = arith.constant 0 : i32
    %c0_i32_0 = arith.constant 0 : i32
    return %c0_i32, %arg0 : i32, i32
  }
  func.func @transform_3(%arg0: i32) -> (i32, i32) {
    %c0_i32 = arith.constant 0 : i32
    %c0_i32_0 = arith.constant 0 : i32
    return %c0_i32, %arg0 : i32, i32
  }
}

</mosaic_0001>

<llo_original>
// kernel: fullnet_forward.1
$region0: #{fullnet_forward.1}
  #allocation0 [shape = 'u32[]', space=smem, size = 0x4, offset = 0x4, fixed_abs, tag = 'smem constant byte address 0x4 - core index']
  #allocation1 [shape = 'u32[144,128]{1,0:T(1,128)}', space=vmem, size = 0x12000, scoped, tag = 'internal scratch']
  %s0 = inlined_call_operand.vmem [shape: f32[5,128,128], index: 0, kind: input, shape index: {}]
  %s1 = inlined_call_operand.vmem [shape: f32[5,128,1], index: 1, kind: input, shape index: {}]
  %s2 = inlined_call_operand.vmem [shape: f32[128,256], index: 2, kind: input, shape index: {}]
  %s3 = inlined_call_operand.vmem [shape: f32[1,256], index: 3, kind: output, shape index: {}]
  %s4 = sld [smem:[#allocation0]]
  $region22: #{fullnet_forward.1} parent=0
    _
  %s6 = ssub.s32 1, %s4
  %s7 = scalar_select 0, %s6, %s4
  // Predicated region
  $region2: #{fullnet_forward.1} parent=0 // pred_check
    _
  $region3: #{fullnet_forward.1} parent=0 // pred_check_branch
    %9 = sbr.rel (0) target = $region5
  $region4: #{fullnet_forward.1} parent=0 // pred_region
    _
  $region5: #{fullnet_forward.1} parent=0 // pred_fallthru
    _
  // Predicated region
  $region6: #{fullnet_forward.1} parent=0 // pred_check
    _
  $region7: #{fullnet_forward.1} parent=0 // pred_check_branch
    %11 = sbr.rel (0) target = $region9
  $region8: #{fullnet_forward.1} parent=0 // pred_region
    _
  $region9: #{fullnet_forward.1} parent=0 // pred_fallthru
    _
  // Predicated region
  $region10: #{fullnet_forward.1} parent=0 // pred_check
    _
  $region11: #{fullnet_forward.1} parent=0 // pred_check_branch
    %13 = sbr.rel (0) target = $region13
  $region12: #{fullnet_forward.1} parent=0 // pred_region
    _
  $region13: #{fullnet_forward.1} parent=0 // pred_fallthru
    _
  %v14 = vld [vmem:[%s2] sm:$0xff]
  %v15 = vld [vmem:[%s2 + $0x8] sm:$0xff]
  %v16 = vld [vmem:[%s2 + $0x10] sm:$0xff]
  %v17 = vld [vmem:[%s2 + $0x18] sm:$0xff]
  %v18 = vld [vmem:[%s2 + $0x20] sm:$0xff]
  %v19 = vld [vmem:[%s2 + $0x28] sm:$0xff]
  %v20 = vld [vmem:[%s2 + $0x30] sm:$0xff]
  %v21 = vld [vmem:[%s2 + $0x38] sm:$0xff]
  %v22 = vld [vmem:[%s2 + $0x40] sm:$0xff]
  %v23 = vld [vmem:[%s2 + $0x48] sm:$0xff]
  %v24 = vld [vmem:[%s2 + $0x50] sm:$0xff]
  %v25 = vld [vmem:[%s2 + $0x58] sm:$0xff]
  %v26 = vld [vmem:[%s2 + $0x60] sm:$0xff]
  %v27 = vld [vmem:[%s2 + $0x68] sm:$0xff]
  %v28 = vld [vmem:[%s2 + $0x70] sm:$0xff]
  %v29 = vld [vmem:[%s2 + $0x78] sm:$0xff]
  %v30 = vld [vmem:[%s2 + $0x80] sm:$0xff]
  %v31 = vld [vmem:[%s2 + $0x88] sm:$0xff]
  %v32 = vld [vmem:[%s2 + $0x90] sm:$0xff]
  %v33 = vld [vmem:[%s2 + $0x98] sm:$0xff]
  %v34 = vld [vmem:[%s2 + $0xa0] sm:$0xff]
  %v35 = vld [vmem:[%s2 + $0xa8] sm:$0xff]
  %v36 = vld [vmem:[%s2 + $0xb0] sm:$0xff]
  %v37 = vld [vmem:[%s2 + $0xb8] sm:$0xff]
  %v38 = vld [vmem:[%s2 + $0xc0] sm:$0xff]
  %v39 = vld [vmem:[%s2 + $0xc8] sm:$0xff]
  %v40 = vld [vmem:[%s2 + $0xd0] sm:$0xff]
  %v41 = vld [vmem:[%s2 + $0xd8] sm:$0xff]
  %v42 = vld [vmem:[%s2 + $0xe0] sm:$0xff]
  %v43 = vld [vmem:[%s2 + $0xe8] sm:$0xff]
  %v44 = vld [vmem:[%s2 + $0xf0] sm:$0xff]
  %v45 = vld [vmem:[%s2 + $0xf8] sm:$0xff]
  %v46 = vld [vmem:[%s0] sm:$0xff]
  %v47 = vld [vmem:[%s0 + $0x8] sm:$0xff]
  %v48 = vld [vmem:[%s0 + $0x10] sm:$0xff]
  %v49 = vld [vmem:[%s0 + $0x18] sm:$0xff]
  %v50 = vld [vmem:[%s0 + $0x20] sm:$0xff]
  %v51 = vld [vmem:[%s0 + $0x28] sm:$0xff]
  %v52 = vld [vmem:[%s0 + $0x30] sm:$0xff]
  %v53 = vld [vmem:[%s0 + $0x38] sm:$0xff]
  %v54 = vld [vmem:[%s0 + $0x40] sm:$0xff]
  %v55 = vld [vmem:[%s0 + $0x48] sm:$0xff]
  %v56 = vld [vmem:[%s0 + $0x50] sm:$0xff]
  %v57 = vld [vmem:[%s0 + $0x58] sm:$0xff]
  %v58 = vld [vmem:[%s0 + $0x60] sm:$0xff]
  %v59 = vld [vmem:[%s0 + $0x68] sm:$0xff]
  %v60 = vld [vmem:[%s0 + $0x70] sm:$0xff]
  %v61 = vld [vmem:[%s0 + $0x78] sm:$0xff]
  %v62 = vld [vmem:[%s1] sm:$0xff]
  %v63 = vld [vmem:[%s1 + $0x8] sm:$0xff]
  %v64 = vld [vmem:[%s1 + $0x10] sm:$0xff]
  %v65 = vld [vmem:[%s1 + $0x18] sm:$0xff]
  %v66 = vld [vmem:[%s1 + $0x20] sm:$0xff]
  %v67 = vld [vmem:[%s1 + $0x28] sm:$0xff]
  %v68 = vld [vmem:[%s1 + $0x30] sm:$0xff]
  %v69 = vld [vmem:[%s1 + $0x38] sm:$0xff]
  %v70 = vld [vmem:[%s1 + $0x40] sm:$0xff]
  %v71 = vld [vmem:[%s1 + $0x48] sm:$0xff]
  %v72 = vld [vmem:[%s1 + $0x50] sm:$0xff]
  %v73 = vld [vmem:[%s1 + $0x58] sm:$0xff]
  %v74 = vld [vmem:[%s1 + $0x60] sm:$0xff]
  %v75 = vld [vmem:[%s1 + $0x68] sm:$0xff]
  %v76 = vld [vmem:[%s1 + $0x70] sm:$0xff]
  %v77 = vld [vmem:[%s1 + $0x78] sm:$0xff]
  %79 = vset.pattern.permute.xlu0 0
  %80 = vperm.xlu0 %79, %v62
  %v81 = vpop.permute.xlu0 %80
  %84 = vset.pattern.permute.xlu0 0
  %85 = vperm.xlu0 %84, %v63
  %v86 = vpop.permute.xlu0 %85
  %89 = vset.pattern.permute.xlu0 0
  %90 = vperm.xlu0 %89, %v64
  %v91 = vpop.permute.xlu0 %90
  %94 = vset.pattern.permute.xlu0 0
  %95 = vperm.xlu0 %94, %v65
  %v96 = vpop.permute.xlu0 %95
  %99 = vset.pattern.permute.xlu0 0
  %100 = vperm.xlu0 %99, %v66
  %v101 = vpop.permute.xlu0 %100
  %104 = vset.pattern.permute.xlu0 0
  %105 = vperm.xlu0 %104, %v67
  %v106 = vpop.permute.xlu0 %105
  %109 = vset.pattern.permute.xlu0 0
  %110 = vperm.xlu0 %109, %v68
  %v111 = vpop.permute.xlu0 %110
  %114 = vset.pattern.permute.xlu0 0
  %115 = vperm.xlu0 %114, %v69
  %v116 = vpop.permute.xlu0 %115
  %119 = vset.pattern.permute.xlu0 0
  %120 = vperm.xlu0 %119, %v70
  %v121 = vpop.permute.xlu0 %120
  %124 = vset.pattern.permute.xlu0 0
  %125 = vperm.xlu0 %124, %v71
  %v126 = vpop.permute.xlu0 %125
  %129 = vset.pattern.permute.xlu0 0
  %130 = vperm.xlu0 %129, %v72
  %v131 = vpop.permute.xlu0 %130
  %134 = vset.pattern.permute.xlu0 0
  %135 = vperm.xlu0 %134, %v73
  %v136 = vpop.permute.xlu0 %135
  %139 = vset.pattern.permute.xlu0 0
  %140 = vperm.xlu0 %139, %v74
  %v141 = vpop.permute.xlu0 %140
  %144 = vset.pattern.permute.xlu0 0
  %145 = vperm.xlu0 %144, %v75
  %v146 = vpop.permute.xlu0 %145
  %149 = vset.pattern.permute.xlu0 0
  %150 = vperm.xlu0 %149, %v76
  %v151 = vpop.permute.xlu0 %150
  %154 = vset.pattern.permute.xlu0 0
  %155 = vperm.xlu0 %154, %v77
  %v156 = vpop.permute.xlu0 %155
  %158 = vmatprep.subr.mxu0 %v45
  %159 = vmatpush1.msra.mxu0 %v44
  %160 = vmatprep.subr.mxu0 %v43
  %161 = vmatpush1.msra.mxu0 %v42
  %162 = vmatprep.subr.mxu0 %v41
  %163 = vmatpush1.msra.mxu0 %v40
  %164 = vmatprep.subr.mxu0 %v39
  %165 = vmatpush1.msra.mxu0 %v38
  %166 = vmatprep.subr.mxu0 %v37
  %167 = vmatpush1.msra.mxu0 %v36
  %168 = vmatprep.subr.mxu0 %v35
  %169 = vmatpush1.msra.mxu0 %v34
  %170 = vmatprep.subr.mxu0 %v33
  %171 = vmatpush1.msra.mxu0 %v32
  %172 = vmatprep.subr.mxu0 %v31
  %173 = vmatpush1.msra.mxu0 %v30
  %174 = vmatprep.subr.mxu0 %v29
  %175 = vmatpush1.msra.mxu0 %v28
  %176 = vmatprep.subr.mxu0 %v27
  %177 = vmatpush1.msra.mxu0 %v26
  %178 = vmatprep.subr.mxu0 %v25
  %179 = vmatpush1.msra.mxu0 %v24
  %180 = vmatprep.subr.mxu0 %v23
  %181 = vmatpush1.msra.mxu0 %v22
  %182 = vmatprep.subr.mxu0 %v21
  %183 = vmatpush1.msra.mxu0 %v20
  %184 = vmatprep.subr.mxu0 %v19
  %185 = vmatpush1.msra.mxu0 %v18
  %186 = vmatprep.subr.mxu0 %v17
  %187 = vmatpush1.msra.mxu0 %v16
  %188 = vmatprep.subr.mxu0 %v15
  %189 = vmatpush1.msra.mxu0 %v14
  %190 = vmatprep.subr.mxu0 0.0
  %191 = vmatpush2.msra.mxu0 0.0
  %192 = vmatprep.subr.mxu0 0.0
  %193 = vmatpush2.msra.mxu0 0.0
  %194 = vmatprep.subr.mxu0 0.0
  %195 = vmatpush2.msra.mxu0 0.0
  %196 = vmatprep.subr.mxu0 0.0
  %197 = vmatpush2.msra.mxu0 0.0
  %198 = vmatprep.subr.mxu0 0.0
  %199 = vmatpush2.msra.mxu0 0.0
  %200 = vmatprep.subr.mxu0 0.0
  %201 = vmatpush2.msra.mxu0 0.0
  %202 = vmatprep.subr.mxu0 0.0
  %203 = vmatpush2.msra.mxu0 0.0
  %204 = vmatprep.subr.mxu0 0.0
  %205 = vmatpush2.msra.mxu0 0.0
  %206 = vmatprep.subr.mxu0 0.0
  %207 = vmatpush2.msra.mxu0 0.0
  %208 = vmatprep.subr.mxu0 0.0
  %209 = vmatpush2.msra.mxu0 0.0
  %210 = vmatprep.subr.mxu0 0.0
  %211 = vmatpush2.msra.mxu0 0.0
  %212 = vmatprep.subr.mxu0 0.0
  %213 = vmatpush2.msra.mxu0 0.0
  %214 = vmatprep.subr.mxu0 0.0
  %215 = vmatpush2.msra.mxu0 0.0
  %216 = vmatprep.subr.mxu0 0.0
  %217 = vmatpush2.msra.mxu0 0.0
  %218 = vmatprep.subr.mxu0 0.0
  %219 = vmatpush2.msra.mxu0 0.0
  %220 = vmatprep.subr.mxu0 0.0
  %221 = vmatpush2.msra.mxu0 0.0
  %222 = vmatprep.mubr.f32.mxu0 0.0
  %223 = vmatmul.mubr.f32.gmra.mxu0 %v46
  %v224 = vpop.f32.mrf.mxu0
  %v225 = vadd.f32 %v81, %v224
  %v226 = vpop.f32.mrf.mxu0
  %v227 = vadd.f32 %v81, %v226
  %228 = vmatprep.mubr.f32.mxu0 0.0
  %229 = vmatmul.mubr.f32.gmra.mxu0 %v47
  %v230 = vpop.f32.mrf.mxu0
  %v231 = vadd.f32 %v86, %v230
  %v232 = vpop.f32.mrf.mxu0
  %v233 = vadd.f32 %v86, %v232
  %234 = vmatprep.mubr.f32.mxu0 0.0
  %235 = vmatmul.mubr.f32.gmra.mxu0 %v48
  %v236 = vpop.f32.mrf.mxu0
  %v237 = vadd.f32 %v91, %v236
  %v238 = vpop.f32.mrf.mxu0
  %v239 = vadd.f32 %v91, %v238
  %240 = vmatprep.mubr.f32.mxu0 0.0
  %241 = vmatmul.mubr.f32.gmra.mxu0 %v49
  %v242 = vpop.f32.mrf.mxu0
  %v243 = vadd.f32 %v96, %v242
  %v244 = vpop.f32.mrf.mxu0
  %v245 = vadd.f32 %v96, %v244
  %246 = vmatprep.mubr.f32.mxu0 0.0
  %247 = vmatmul.mubr.f32.gmra.mxu0 %v50
  %v248 = vpop.f32.mrf.mxu0
  %v249 = vadd.f32 %v101, %v248
  %v250 = vpop.f32.mrf.mxu0
  %v251 = vadd.f32 %v101, %v250
  %252 = vmatprep.mubr.f32.mxu0 0.0
  %253 = vmatmul.mubr.f32.gmra.mxu0 %v51
  %v254 = vpop.f32.mrf.mxu0
  %v255 = vadd.f32 %v106, %v254
  %v256 = vpop.f32.mrf.mxu0
  %v257 = vadd.f32 %v106, %v256
  %258 = vmatprep.mubr.f32.mxu0 0.0
  %259 = vmatmul.mubr.f32.gmra.mxu0 %v52
  %v260 = vpop.f32.mrf.mxu0
  %v261 = vadd.f32 %v111, %v260
  %v262 = vpop.f32.mrf.mxu0
  %v263 = vadd.f32 %v111, %v262
  %264 = vmatprep.mubr.f32.mxu0 0.0
  %265 = vmatmul.mubr.f32.gmra.mxu0 %v53
  %v266 = vpop.f32.mrf.mxu0
  %v267 = vadd.f32 %v116, %v266
  %v268 = vpop.f32.mrf.mxu0
  %v269 = vadd.f32 %v116, %v268
  %270 = vmatprep.mubr.f32.mxu0 0.0
  %271 = vmatmul.mubr.f32.gmra.mxu0 %v54
  %v272 = vpop.f32.mrf.mxu0
  %v273 = vadd.f32 %v121, %v272
  %v274 = vpop.f32.mrf.mxu0
  %v275 = vadd.f32 %v121, %v274
  %276 = vmatprep.mubr.f32.mxu0 0.0
  %277 = vmatmul.mubr.f32.gmra.mxu0 %v55
  %v278 = vpop.f32.mrf.mxu0
  %v279 = vadd.f32 %v126, %v278
  %v280 = vpop.f32.mrf.mxu0
  %v281 = vadd.f32 %v126, %v280
  %282 = vmatprep.mubr.f32.mxu0 0.0
  %283 = vmatmul.mubr.f32.gmra.mxu0 %v56
  %v284 = vpop.f32.mrf.mxu0
  %v285 = vadd.f32 %v131, %v284
  %v286 = vpop.f32.mrf.mxu0
  %v287 = vadd.f32 %v131, %v286
  %288 = vmatprep.mubr.f32.mxu0 0.0
  %289 = vmatmul.mubr.f32.gmra.mxu0 %v57
  %v290 = vpop.f32.mrf.mxu0
  %v291 = vadd.f32 %v136, %v290
  %v292 = vpop.f32.mrf.mxu0
  %v293 = vadd.f32 %v136, %v292
  %294 = vmatprep.mubr.f32.mxu0 0.0
  %295 = vmatmul.mubr.f32.gmra.mxu0 %v58
  %v296 = vpop.f32.mrf.mxu0
  %v297 = vadd.f32 %v141, %v296
  %v298 = vpop.f32.mrf.mxu0
  %v299 = vadd.f32 %v141, %v298
  %300 = vmatprep.mubr.f32.mxu0 0.0
  %301 = vmatmul.mubr.f32.gmra.mxu0 %v59
  %v302 = vpop.f32.mrf.mxu0
  %v303 = vadd.f32 %v146, %v302
  %v304 = vpop.f32.mrf.mxu0
  %v305 = vadd.f32 %v146, %v304
  %306 = vmatprep.mubr.f32.mxu0 0.0
  %307 = vmatmul.mubr.f32.gmra.mxu0 %v60
  %v308 = vpop.f32.mrf.mxu0
  %v309 = vadd.f32 %v151, %v308
  %v310 = vpop.f32.mrf.mxu0
  %v311 = vadd.f32 %v151, %v310
  %312 = vmatprep.mubr.f32.mxu0 0.0
  %313 = vmatmul.mubr.f32.gmra.mxu0 %v61
  %v314 = vpop.f32.mrf.mxu0
  %v315 = vadd.f32 %v156, %v314
  %v316 = vpop.f32.mrf.mxu0
  %v317 = vadd.f32 %v156, %v316
  %318 = vdwg.mxu0
  %v319 = vmax.f32 %v225, 0.0
  %v320 = vmax.f32 %v227, 0.0
  %v321 = vmax.f32 %v231, 0.0
  %v322 = vmax.f32 %v233, 0.0
  %v323 = vmax.f32 %v237, 0.0
  %v324 = vmax.f32 %v239, 0.0
  %v325 = vmax.f32 %v243, 0.0
  %v326 = vmax.f32 %v245, 0.0
  %v327 = vmax.f32 %v249, 0.0
  %v328 = vmax.f32 %v251, 0.0
  %v329 = vmax.f32 %v255, 0.0
  %v330 = vmax.f32 %v257, 0.0
  %v331 = vmax.f32 %v261, 0.0
  %v332 = vmax.f32 %v263, 0.0
  %v333 = vmax.f32 %v267, 0.0
  %v334 = vmax.f32 %v269, 0.0
  %v335 = vmax.f32 %v273, 0.0
  %v336 = vmax.f32 %v275, 0.0
  %v337 = vmax.f32 %v279, 0.0
  %v338 = vmax.f32 %v281, 0.0
  %v339 = vmax.f32 %v285, 0.0
  %v340 = vmax.f32 %v287, 0.0
  %v341 = vmax.f32 %v291, 0.0
  %v342 = vmax.f32 %v293, 0.0
  %v343 = vmax.f32 %v297, 0.0
  %v344 = vmax.f32 %v299, 0.0
  %v345 = vmax.f32 %v303, 0.0
  %v346 = vmax.f32 %v305, 0.0
  %v347 = vmax.f32 %v309, 0.0
  %v348 = vmax.f32 %v311, 0.0
  %v349 = vmax.f32 %v315, 0.0
  %v350 = vmax.f32 %v317, 0.0
  %s351 = scalar_lea.vmem %s0, 128
  %v352 = vld [vmem:[%s351] sm:$0xff]
  %v353 = vld [vmem:[%s351 + $0x8] sm:$0xff]
  %v354 = vld [vmem:[%s351 + $0x10] sm:$0xff]
  %v355 = vld [vmem:[%s351 + $0x18] sm:$0xff]
  %v356 = vld [vmem:[%s351 + $0x20] sm:$0xff]
  %v357 = vld [vmem:[%s351 + $0x28] sm:$0xff]
  %v358 = vld [vmem:[%s351 + $0x30] sm:$0xff]
  %v359 = vld [vmem:[%s351 + $0x38] sm:$0xff]
  %v360 = vld [vmem:[%s351 + $0x40] sm:$0xff]
  %v361 = vld [vmem:[%s351 + $0x48] sm:$0xff]
  %v362 = vld [vmem:[%s351 + $0x50] sm:$0xff]
  %v363 = vld [vmem:[%s351 + $0x58] sm:$0xff]
  %v364 = vld [vmem:[%s351 + $0x60] sm:$0xff]
  %v365 = vld [vmem:[%s351 + $0x68] sm:$0xff]
  %v366 = vld [vmem:[%s351 + $0x70] sm:$0xff]
  %v367 = vld [vmem:[%s351 + $0x78] sm:$0xff]
  %s368 = scalar_lea.vmem %s1, 128
  %v369 = vld [vmem:[%s368] sm:$0xff]
  %v370 = vld [vmem:[%s368 + $0x8] sm:$0xff]
  %v371 = vld [vmem:[%s368 + $0x10] sm:$0xff]
  %v372 = vld [vmem:[%s368 + $0x18] sm:$0xff]
  %v373 = vld [vmem:[%s368 + $0x20] sm:$0xff]
  %v374 = vld [vmem:[%s368 + $0x28] sm:$0xff]
  %v375 = vld [vmem:[%s368 + $0x30] sm:$0xff]
  %v376 = vld [vmem:[%s368 + $0x38] sm:$0xff]
  %v377 = vld [vmem:[%s368 + $0x40] sm:$0xff]
  %v378 = vld [vmem:[%s368 + $0x48] sm:$0xff]
  %v379 = vld [vmem:[%s368 + $0x50] sm:$0xff]
  %v380 = vld [vmem:[%s368 + $0x58] sm:$0xff]
  %v381 = vld [vmem:[%s368 + $0x60] sm:$0xff]
  %v382 = vld [vmem:[%s368 + $0x68] sm:$0xff]
  %v383 = vld [vmem:[%s368 + $0x70] sm:$0xff]
  %v384 = vld [vmem:[%s368 + $0x78] sm:$0xff]
  %386 = vset.pattern.permute.xlu0 0
  %387 = vperm.xlu0 %386, %v369
  %v388 = vpop.permute.xlu0 %387
  %391 = vset.pattern.permute.xlu0 0
  %392 = vperm.xlu0 %391, %v370
  %v393 = vpop.permute.xlu0 %392
  %396 = vset.pattern.permute.xlu0 0
  %397 = vperm.xlu0 %396, %v371
  %v398 = vpop.permute.xlu0 %397
  %401 = vset.pattern.permute.xlu0 0
  %402 = vperm.xlu0 %401, %v372
  %v403 = vpop.permute.xlu0 %402
  %406 = vset.pattern.permute.xlu0 0
  %407 = vperm.xlu0 %406, %v373
  %v408 = vpop.permute.xlu0 %407
  %411 = vset.pattern.permute.xlu0 0
  %412 = vperm.xlu0 %411, %v374
  %v413 = vpop.permute.xlu0 %412
  %416 = vset.pattern.permute.xlu0 0
  %417 = vperm.xlu0 %416, %v375
  %v418 = vpop.permute.xlu0 %417
  %421 = vset.pattern.permute.xlu0 0
  %422 = vperm.xlu0 %421, %v376
  %v423 = vpop.permute.xlu0 %422
  %426 = vset.pattern.permute.xlu0 0
  %427 = vperm.xlu0 %426, %v377
  %v428 = vpop.permute.xlu0 %427
  %431 = vset.pattern.permute.xlu0 0
  %432 = vperm.xlu0 %431, %v378
  %v433 = vpop.permute.xlu0 %432
  %436 = vset.pattern.permute.xlu0 0
  %437 = vperm.xlu0 %436, %v379
  %v438 = vpop.permute.xlu0 %437
  %441 = vset.pattern.permute.xlu0 0
  %442 = vperm.xlu0 %441, %v380
  %v443 = vpop.permute.xlu0 %442
  %446 = vset.pattern.permute.xlu0 0
  %447 = vperm.xlu0 %446, %v381
  %v448 = vpop.permute.xlu0 %447
  %451 = vset.pattern.permute.xlu0 0
  %452 = vperm.xlu0 %451, %v382
  %v453 = vpop.permute.xlu0 %452
  %456 = vset.pattern.permute.xlu0 0
  %457 = vperm.xlu0 %456, %v383
  %v458 = vpop.permute.xlu0 %457
  %461 = vset.pattern.permute.xlu0 0
  %462 = vperm.xlu0 %461, %v384
  %v463 = vpop.permute.xlu0 %462
  %465 = vmatprep.subr.mxu0 %v350
  %466 = vmatpush1.msra.mxu0 %v349
  %467 = vmatprep.subr.mxu0 %v348
  %468 = vmatpush1.msra.mxu0 %v347
  %469 = vmatprep.subr.mxu0 %v346
  %470 = vmatpush1.msra.mxu0 %v345
  %471 = vmatprep.subr.mxu0 %v344
  %472 = vmatpush1.msra.mxu0 %v343
  %473 = vmatprep.subr.mxu0 %v342
  %474 = vmatpush1.msra.mxu0 %v341
  %475 = vmatprep.subr.mxu0 %v340
  %476 = vmatpush1.msra.mxu0 %v339
  %477 = vmatprep.subr.mxu0 %v338
  %478 = vmatpush1.msra.mxu0 %v337
  %479 = vmatprep.subr.mxu0 %v336
  %480 = vmatpush1.msra.mxu0 %v335
  %481 = vmatprep.subr.mxu0 %v334
  %482 = vmatpush1.msra.mxu0 %v333
  %483 = vmatprep.subr.mxu0 %v332
  %484 = vmatpush1.msra.mxu0 %v331
  %485 = vmatprep.subr.mxu0 %v330
  %486 = vmatpush1.msra.mxu0 %v329
  %487 = vmatprep.subr.mxu0 %v328
  %488 = vmatpush1.msra.mxu0 %v327
  %489 = vmatprep.subr.mxu0 %v326
  %490 = vmatpush1.msra.mxu0 %v325
  %491 = vmatprep.subr.mxu0 %v324
  %492 = vmatpush1.msra.mxu0 %v323
  %493 = vmatprep.subr.mxu0 %v322
  %494 = vmatpush1.msra.mxu0 %v321
  %495 = vmatprep.subr.mxu0 %v320
  %496 = vmatpush1.msra.mxu0 %v319
  %497 = vmatprep.subr.mxu0 0.0
  %498 = vmatpush2.msra.mxu0 0.0
  %499 = vmatprep.subr.mxu0 0.0
  %500 = vmatpush2.msra.mxu0 0.0
  %501 = vmatprep.subr.mxu0 0.0
  %502 = vmatpush2.msra.mxu0 0.0
  %503 = vmatprep.subr.mxu0 0.0
  %504 = vmatpush2.msra.mxu0 0.0
  %505 = vmatprep.subr.mxu0 0.0
  %506 = vmatpush2.msra.mxu0 0.0
  %507 = vmatprep.subr.mxu0 0.0
  %508 = vmatpush2.msra.mxu0 0.0
  %509 = vmatprep.subr.mxu0 0.0
  %510 = vmatpush2.msra.mxu0 0.0
  %511 = vmatprep.subr.mxu0 0.0
  %512 = vmatpush2.msra.mxu0 0.0
  %513 = vmatprep.subr.mxu0 0.0
  %514 = vmatpush2.msra.mxu0 0.0
  %515 = vmatprep.subr.mxu0 0.0
  %516 = vmatpush2.msra.mxu0 0.0
  %517 = vmatprep.subr.mxu0 0.0
  %518 = vmatpush2.msra.mxu0 0.0
  %519 = vmatprep.subr.mxu0 0.0
  %520 = vmatpush2.msra.mxu0 0.0
  %521 = vmatprep.subr.mxu0 0.0
  %522 = vmatpush2.msra.mxu0 0.0
  %523 = vmatprep.subr.mxu0 0.0
  %524 = vmatpush2.msra.mxu0 0.0
  %525 = vmatprep.subr.mxu0 0.0
  %526 = vmatpush2.msra.mxu0 0.0
  %527 = vmatprep.subr.mxu0 0.0
  %528 = vmatpush2.msra.mxu0 0.0
  %529 = vmatprep.mubr.f32.mxu0 0.0
  %530 = vmatmul.mubr.f32.gmra.mxu0 %v352
  %v531 = vpop.f32.mrf.mxu0
  %v532 = vadd.f32 %v388, %v531
  %v533 = vpop.f32.mrf.mxu0
  %v534 = vadd.f32 %v388, %v533
  %535 = vmatprep.mubr.f32.mxu0 0.0
  %536 = vmatmul.mubr.f32.gmra.mxu0 %v353
  %v537 = vpop.f32.mrf.mxu0
  %v538 = vadd.f32 %v393, %v537
  %v539 = vpop.f32.mrf.mxu0
  %v540 = vadd.f32 %v393, %v539
  %541 = vmatprep.mubr.f32.mxu0 0.0
  %542 = vmatmul.mubr.f32.gmra.mxu0 %v354
  %v543 = vpop.f32.mrf.mxu0
  %v544 = vadd.f32 %v398, %v543
  %v545 = vpop.f32.mrf.mxu0
  %v546 = vadd.f32 %v398, %v545
  %547 = vmatprep.mubr.f32.mxu0 0.0
  %548 = vmatmul.mubr.f32.gmra.mxu0 %v355
  %v549 = vpop.f32.mrf.mxu0
  %v550 = vadd.f32 %v403, %v549
  %v551 = vpop.f32.mrf.mxu0
  %v552 = vadd.f32 %v403, %v551
  %553 = vmatprep.mubr.f32.mxu0 0.0
  %554 = vmatmul.mubr.f32.gmra.mxu0 %v356
  %v555 = vpop.f32.mrf.mxu0
  %v556 = vadd.f32 %v408, %v555
  %v557 = vpop.f32.mrf.mxu0
  %v558 = vadd.f32 %v408, %v557
  %559 = vmatprep.mubr.f32.mxu0 0.0
  %560 = vmatmul.mubr.f32.gmra.mxu0 %v357
  %v561 = vpop.f32.mrf.mxu0
  %v562 = vadd.f32 %v413, %v561
  %v563 = vpop.f32.mrf.mxu0
  %v564 = vadd.f32 %v413, %v563
  %565 = vmatprep.mubr.f32.mxu0 0.0
  %566 = vmatmul.mubr.f32.gmra.mxu0 %v358
  %v567 = vpop.f32.mrf.mxu0
  %v568 = vadd.f32 %v418, %v567
  %v569 = vpop.f32.mrf.mxu0
  %v570 = vadd.f32 %v418, %v569
  %571 = vmatprep.mubr.f32.mxu0 0.0
  %572 = vmatmul.mubr.f32.gmra.mxu0 %v359
  %v573 = vpop.f32.mrf.mxu0
  %v574 = vadd.f32 %v423, %v573
  %v575 = vpop.f32.mrf.mxu0
  %v576 = vadd.f32 %v423, %v575
  %577 = vmatprep.mubr.f32.mxu0 0.0
  %578 = vmatmul.mubr.f32.gmra.mxu0 %v360
  %v579 = vpop.f32.mrf.mxu0
  %v580 = vadd.f32 %v428, %v579
  %v581 = vpop.f32.mrf.mxu0
  %v582 = vadd.f32 %v428, %v581
  %583 = vmatprep.mubr.f32.mxu0 0.0
  %584 = vmatmul.mubr.f32.gmra.mxu0 %v361
  %v585 = vpop.f32.mrf.mxu0
  %v586 = vadd.f32 %v433, %v585
  %v587 = vpop.f32.mrf.mxu0
  %v588 = vadd.f32 %v433, %v587
  %589 = vmatprep.mubr.f32.mxu0 0.0
  %590 = vmatmul.mubr.f32.gmra.mxu0 %v362
  %v591 = vpop.f32.mrf.mxu0
  %v592 = vadd.f32 %v438, %v591
  %v593 = vpop.f32.mrf.mxu0
  %v594 = vadd.f32 %v438, %v593
  %595 = vmatprep.mubr.f32.mxu0 0.0
  %596 = vmatmul.mubr.f32.gmra.mxu0 %v363
  %v597 = vpop.f32.mrf.mxu0
  %v598 = vadd.f32 %v443, %v597
  %v599 = vpop.f32.mrf.mxu0
  %v600 = vadd.f32 %v443, %v599
  %601 = vmatprep.mubr.f32.mxu0 0.0
  %602 = vmatmul.mubr.f32.gmra.mxu0 %v364
  %v603 = vpop.f32.mrf.mxu0
  %v604 = vadd.f32 %v448, %v603
  %v605 = vpop.f32.mrf.mxu0
  %v606 = vadd.f32 %v448, %v605
  %607 = vmatprep.mubr.f32.mxu0 0.0
  %608 = vmatmul.mubr.f32.gmra.mxu0 %v365
  %v609 = vpop.f32.mrf.mxu0
  %v610 = vadd.f32 %v453, %v609
  %v611 = vpop.f32.mrf.mxu0
  %v612 = vadd.f32 %v453, %v611
  %613 = vmatprep.mubr.f32.mxu0 0.0
  %614 = vmatmul.mubr.f32.gmra.mxu0 %v366
  %v615 = vpop.f32.mrf.mxu0
  %v616 = vadd.f32 %v458, %v615
  %v617 = vpop.f32.mrf.mxu0
  %v618 = vadd.f32 %v458, %v617
  %619 = vmatprep.mubr.f32.mxu0 0.0
  %620 = vmatmul.mubr.f32.gmra.mxu0 %v367
  %v621 = vpop.f32.mrf.mxu0
  %v622 = vadd.f32 %v463, %v621
  %v623 = vpop.f32.mrf.mxu0
  %v624 = vadd.f32 %v463, %v623
  %625 = vdwg.mxu0
  %v626 = vmax.f32 %v532, 0.0
  %v627 = vmax.f32 %v534, 0.0
  %v628 = vmax.f32 %v538, 0.0
  %v629 = vmax.f32 %v540, 0.0
  %v630 = vmax.f32 %v544, 0.0
  %v631 = vmax.f32 %v546, 0.0
  %v632 = vmax.f32 %v550, 0.0
  %v633 = vmax.f32 %v552, 0.0
  %v634 = vmax.f32 %v556, 0.0
  %v635 = vmax.f32 %v558, 0.0
  %v636 = vmax.f32 %v562, 0.0
  %v637 = vmax.f32 %v564, 0.0
  %v638 = vmax.f32 %v568, 0.0
  %v639 = vmax.f32 %v570, 0.0
  %v640 = vmax.f32 %v574, 0.0
  %v641 = vmax.f32 %v576, 0.0
  %v642 = vmax.f32 %v580, 0.0
  %v643 = vmax.f32 %v582, 0.0
  %v644 = vmax.f32 %v586, 0.0
  %v645 = vmax.f32 %v588, 0.0
  %v646 = vmax.f32 %v592, 0.0
  %v647 = vmax.f32 %v594, 0.0
  %v648 = vmax.f32 %v598, 0.0
  %v649 = vmax.f32 %v600, 0.0
  %v650 = vmax.f32 %v604, 0.0
  %v651 = vmax.f32 %v606, 0.0
  %v652 = vmax.f32 %v610, 0.0
  %v653 = vmax.f32 %v612, 0.0
  %v654 = vmax.f32 %v616, 0.0
  %v655 = vmax.f32 %v618, 0.0
  %v656 = vmax.f32 %v622, 0.0
  %v657 = vmax.f32 %v624, 0.0
  %s658 = scalar_lea.vmem %s0, 256
  %v659 = vld [vmem:[%s658] sm:$0xff]
  %v660 = vld [vmem:[%s658 + $0x8] sm:$0xff]
  %v661 = vld [vmem:[%s658 + $0x10] sm:$0xff]
  %v662 = vld [vmem:[%s658 + $0x18] sm:$0xff]
  %v663 = vld [vmem:[%s658 + $0x20] sm:$0xff]
  %v664 = vld [vmem:[%s658 + $0x28] sm:$0xff]
  %v665 = vld [vmem:[%s658 + $0x30] sm:$0xff]
  %v666 = vld [vmem:[%s658 + $0x38] sm:$0xff]
  %v667 = vld [vmem:[%s658 + $0x40] sm:$0xff]
  %v668 = vld [vmem:[%s658 + $0x48] sm:$0xff]
  %v669 = vld [vmem:[%s658 + $0x50] sm:$0xff]
  %v670 = vld [vmem:[%s658 + $0x58] sm:$0xff]
  %v671 = vld [vmem:[%s658 + $0x60] sm:$0xff]
  %v672 = vld [vmem:[%s658 + $0x68] sm:$0xff]
  %v673 = vld [vmem:[%s658 + $0x70] sm:$0xff]
  %v674 = vld [vmem:[%s658 + $0x78] sm:$0xff]
  %s675 = scalar_lea.vmem %s1, 256
  %v676 = vld [vmem:[%s675] sm:$0xff]
  %v677 = vld [vmem:[%s675 + $0x8] sm:$0xff]
  %v678 = vld [vmem:[%s675 + $0x10] sm:$0xff]
  %v679 = vld [vmem:[%s675 + $0x18] sm:$0xff]
  %v680 = vld [vmem:[%s675 + $0x20] sm:$0xff]
  %v681 = vld [vmem:[%s675 + $0x28] sm:$0xff]
  %v682 = vld [vmem:[%s675 + $0x30] sm:$0xff]
  %v683 = vld [vmem:[%s675 + $0x38] sm:$0xff]
  %v684 = vld [vmem:[%s675 + $0x40] sm:$0xff]
  %v685 = vld [vmem:[%s675 + $0x48] sm:$0xff]
  %v686 = vld [vmem:[%s675 + $0x50] sm:$0xff]
  %v687 = vld [vmem:[%s675 + $0x58] sm:$0xff]
  %v688 = vld [vmem:[%s675 + $0x60] sm:$0xff]
  %v689 = vld [vmem:[%s675 + $0x68] sm:$0xff]
  %v690 = vld [vmem:[%s675 + $0x70] sm:$0xff]
  %v691 = vld [vmem:[%s675 + $0x78] sm:$0xff]
  %693 = vset.pattern.permute.xlu0 0
  %694 = vperm.xlu0 %693, %v676
  %v695 = vpop.permute.xlu0 %694
  %698 = vset.pattern.permute.xlu0 0
  %699 = vperm.xlu0 %698, %v677
  %v700 = vpop.permute.xlu0 %699
  %703 = vset.pattern.permute.xlu0 0
  %704 = vperm.xlu0 %703, %v678
  %v705 = vpop.permute.xlu0 %704
  %708 = vset.pattern.permute.xlu0 0
  %709 = vperm.xlu0 %708, %v679
  %v710 = vpop.permute.xlu0 %709
  %713 = vset.pattern.permute.xlu0 0
  %714 = vperm.xlu0 %713, %v680
  %v715 = vpop.permute.xlu0 %714
  %718 = vset.pattern.permute.xlu0 0
  %719 = vperm.xlu0 %718, %v681
  %v720 = vpop.permute.xlu0 %719
  %723 = vset.pattern.permute.xlu0 0
  %724 = vperm.xlu0 %723, %v682
  %v725 = vpop.permute.xlu0 %724
  %728 = vset.pattern.permute.xlu0 0
  %729 = vperm.xlu0 %728, %v683
  %v730 = vpop.permute.xlu0 %729
  %733 = vset.pattern.permute.xlu0 0
  %734 = vperm.xlu0 %733, %v684
  %v735 = vpop.permute.xlu0 %734
  %738 = vset.pattern.permute.xlu0 0
  %739 = vperm.xlu0 %738, %v685
  %v740 = vpop.permute.xlu0 %739
  %743 = vset.pattern.permute.xlu0 0
  %744 = vperm.xlu0 %743, %v686
  %v745 = vpop.permute.xlu0 %744
  %748 = vset.pattern.permute.xlu0 0
  %749 = vperm.xlu0 %748, %v687
  %v750 = vpop.permute.xlu0 %749
  %753 = vset.pattern.permute.xlu0 0
  %754 = vperm.xlu0 %753, %v688
  %v755 = vpop.permute.xlu0 %754
  %758 = vset.pattern.permute.xlu0 0
  %759 = vperm.xlu0 %758, %v689
  %v760 = vpop.permute.xlu0 %759
  %763 = vset.pattern.permute.xlu0 0
  %764 = vperm.xlu0 %763, %v690
  %v765 = vpop.permute.xlu0 %764
  %768 = vset.pattern.permute.xlu0 0
  %769 = vperm.xlu0 %768, %v691
  %v770 = vpop.permute.xlu0 %769
  %772 = vmatprep.subr.mxu0 %v657
  %773 = vmatpush1.msra.mxu0 %v656
  %774 = vmatprep.subr.mxu0 %v655
  %775 = vmatpush1.msra.mxu0 %v654
  %776 = vmatprep.subr.mxu0 %v653
  %777 = vmatpush1.msra.mxu0 %v652
  %778 = vmatprep.subr.mxu0 %v651
  %779 = vmatpush1.msra.mxu0 %v650
  %780 = vmatprep.subr.mxu0 %v649
  %781 = vmatpush1.msra.mxu0 %v648
  %782 = vmatprep.subr.mxu0 %v647
  %783 = vmatpush1.msra.mxu0 %v646
  %784 = vmatprep.subr.mxu0 %v645
  %785 = vmatpush1.msra.mxu0 %v644
  %786 = vmatprep.subr.mxu0 %v643
  %787 = vmatpush1.msra.mxu0 %v642
  %788 = vmatprep.subr.mxu0 %v641
  %789 = vmatpush1.msra.mxu0 %v640
  %790 = vmatprep.subr.mxu0 %v639
  %791 = vmatpush1.msra.mxu0 %v638
  %792 = vmatprep.subr.mxu0 %v637
  %793 = vmatpush1.msra.mxu0 %v636
  %794 = vmatprep.subr.mxu0 %v635
  %795 = vmatpush1.msra.mxu0 %v634
  %796 = vmatprep.subr.mxu0 %v633
  %797 = vmatpush1.msra.mxu0 %v632
  %798 = vmatprep.subr.mxu0 %v631
  %799 = vmatpush1.msra.mxu0 %v630
  %800 = vmatprep.subr.mxu0 %v629
  %801 = vmatpush1.msra.mxu0 %v628
  %802 = vmatprep.subr.mxu0 %v627
  %803 = vmatpush1.msra.mxu0 %v626
  %804 = vmatprep.subr.mxu0 0.0
  %805 = vmatpush2.msra.mxu0 0.0
  %806 = vmatprep.subr.mxu0 0.0
  %807 = vmatpush2.msra.mxu0 0.0
  %808 = vmatprep.subr.mxu0 0.0
  %809 = vmatpush2.msra.mxu0 0.0
  %810 = vmatprep.subr.mxu0 0.0
  %811 = vmatpush2.msra.mxu0 0.0
  %812 = vmatprep.subr.mxu0 0.0
  %813 = vmatpush2.msra.mxu0 0.0
  %814 = vmatprep.subr.mxu0 0.0
  %815 = vmatpush2.msra.mxu0 0.0
  %816 = vmatprep.subr.mxu0 0.0
  %817 = vmatpush2.msra.mxu0 0.0
  %818 = vmatprep.subr.mxu0 0.0
  %819 = vmatpush2.msra.mxu0 0.0
  %820 = vmatprep.subr.mxu0 0.0
  %821 = vmatpush2.msra.mxu0 0.0
  %822 = vmatprep.subr.mxu0 0.0
  %823 = vmatpush2.msra.mxu0 0.0
  %824 = vmatprep.subr.mxu0 0.0
  %825 = vmatpush2.msra.mxu0 0.0
  %826 = vmatprep.subr.mxu0 0.0
  %827 = vmatpush2.msra.mxu0 0.0
  %828 = vmatprep.subr.mxu0 0.0
  %829 = vmatpush2.msra.mxu0 0.0
  %830 = vmatprep.subr.mxu0 0.0
  %831 = vmatpush2.msra.mxu0 0.0
  %832 = vmatprep.subr.mxu0 0.0
  %833 = vmatpush2.msra.mxu0 0.0
  %834 = vmatprep.subr.mxu0 0.0
  %835 = vmatpush2.msra.mxu0 0.0
  %836 = vmatprep.mubr.f32.mxu0 0.0
  %837 = vmatmul.mubr.f32.gmra.mxu0 %v659
  %v838 = vpop.f32.mrf.mxu0
  %v839 = vadd.f32 %v695, %v838
  %v840 = vpop.f32.mrf.mxu0
  %v841 = vadd.f32 %v695, %v840
  %842 = vmatprep.mubr.f32.mxu0 0.0
  %843 = vmatmul.mubr.f32.gmra.mxu0 %v660
  %v844 = vpop.f32.mrf.mxu0
  %v845 = vadd.f32 %v700, %v844
  %v846 = vpop.f32.mrf.mxu0
  %v847 = vadd.f32 %v700, %v846
  %848 = vmatprep.mubr.f32.mxu0 0.0
  %849 = vmatmul.mubr.f32.gmra.mxu0 %v661
  %v850 = vpop.f32.mrf.mxu0
  %v851 = vadd.f32 %v705, %v850
  %v852 = vpop.f32.mrf.mxu0
  %v853 = vadd.f32 %v705, %v852
  %854 = vmatprep.mubr.f32.mxu0 0.0
  %855 = vmatmul.mubr.f32.gmra.mxu0 %v662
  %v856 = vpop.f32.mrf.mxu0
  %v857 = vadd.f32 %v710, %v856
  %v858 = vpop.f32.mrf.mxu0
  %v859 = vadd.f32 %v710, %v858
  %860 = vmatprep.mubr.f32.mxu0 0.0
  %861 = vmatmul.mubr.f32.gmra.mxu0 %v663
  %v862 = vpop.f32.mrf.mxu0
  %v863 = vadd.f32 %v715, %v862
  %v864 = vpop.f32.mrf.mxu0
  %v865 = vadd.f32 %v715, %v864
  %866 = vmatprep.mubr.f32.mxu0 0.0
  %867 = vmatmul.mubr.f32.gmra.mxu0 %v664
  %v868 = vpop.f32.mrf.mxu0
  %v869 = vadd.f32 %v720, %v868
  %v870 = vpop.f32.mrf.mxu0
  %v871 = vadd.f32 %v720, %v870
  %872 = vmatprep.mubr.f32.mxu0 0.0
  %873 = vmatmul.mubr.f32.gmra.mxu0 %v665
  %v874 = vpop.f32.mrf.mxu0
  %v875 = vadd.f32 %v725, %v874
  %v876 = vpop.f32.mrf.mxu0
  %v877 = vadd.f32 %v725, %v876
  %878 = vmatprep.mubr.f32.mxu0 0.0
  %879 = vmatmul.mubr.f32.gmra.mxu0 %v666
  %v880 = vpop.f32.mrf.mxu0
  %v881 = vadd.f32 %v730, %v880
  %v882 = vpop.f32.mrf.mxu0
  %v883 = vadd.f32 %v730, %v882
  %884 = vmatprep.mubr.f32.mxu0 0.0
  %885 = vmatmul.mubr.f32.gmra.mxu0 %v667
  %v886 = vpop.f32.mrf.mxu0
  %v887 = vadd.f32 %v735, %v886
  %v888 = vpop.f32.mrf.mxu0
  %v889 = vadd.f32 %v735, %v888
  %890 = vmatprep.mubr.f32.mxu0 0.0
  %891 = vmatmul.mubr.f32.gmra.mxu0 %v668
  %v892 = vpop.f32.mrf.mxu0
  %v893 = vadd.f32 %v740, %v892
  %v894 = vpop.f32.mrf.mxu0
  %v895 = vadd.f32 %v740, %v894
  %896 = vmatprep.mubr.f32.mxu0 0.0
  %897 = vmatmul.mubr.f32.gmra.mxu0 %v669
  %v898 = vpop.f32.mrf.mxu0
  %v899 = vadd.f32 %v745, %v898
  %v900 = vpop.f32.mrf.mxu0
  %v901 = vadd.f32 %v745, %v900
  %902 = vmatprep.mubr.f32.mxu0 0.0
  %903 = vmatmul.mubr.f32.gmra.mxu0 %v670
  %v904 = vpop.f32.mrf.mxu0
  %v905 = vadd.f32 %v750, %v904
  %v906 = vpop.f32.mrf.mxu0
  %v907 = vadd.f32 %v750, %v906
  %908 = vmatprep.mubr.f32.mxu0 0.0
  %909 = vmatmul.mubr.f32.gmra.mxu0 %v671
  %v910 = vpop.f32.mrf.mxu0
  %v911 = vadd.f32 %v755, %v910
  %v912 = vpop.f32.mrf.mxu0
  %v913 = vadd.f32 %v755, %v912
  %914 = vmatprep.mubr.f32.mxu0 0.0
  %915 = vmatmul.mubr.f32.gmra.mxu0 %v672
  %v916 = vpop.f32.mrf.mxu0
  %v917 = vadd.f32 %v760, %v916
  %v918 = vpop.f32.mrf.mxu0
  %v919 = vadd.f32 %v760, %v918
  %920 = vmatprep.mubr.f32.mxu0 0.0
  %921 = vmatmul.mubr.f32.gmra.mxu0 %v673
  %v922 = vpop.f32.mrf.mxu0
  %v923 = vadd.f32 %v765, %v922
  %v924 = vpop.f32.mrf.mxu0
  %v925 = vadd.f32 %v765, %v924
  %926 = vmatprep.mubr.f32.mxu0 0.0
  %927 = vmatmul.mubr.f32.gmra.mxu0 %v674
  %v928 = vpop.f32.mrf.mxu0
  %v929 = vadd.f32 %v770, %v928
  %v930 = vpop.f32.mrf.mxu0
  %v931 = vadd.f32 %v770, %v930
  %932 = vdwg.mxu0
  %v933 = vmax.f32 %v839, 0.0
  %v934 = vmax.f32 %v841, 0.0
  %v935 = vmax.f32 %v845, 0.0
  %v936 = vmax.f32 %v847, 0.0
  %v937 = vmax.f32 %v851, 0.0
  %v938 = vmax.f32 %v853, 0.0
  %v939 = vmax.f32 %v857, 0.0
  %v940 = vmax.f32 %v859, 0.0
  %v941 = vmax.f32 %v863, 0.0
  %v942 = vmax.f32 %v865, 0.0
  %v943 = vmax.f32 %v869, 0.0
  %v944 = vmax.f32 %v871, 0.0
  %v945 = vmax.f32 %v875, 0.0
  %v946 = vmax.f32 %v877, 0.0
  %v947 = vmax.f32 %v881, 0.0
  %v948 = vmax.f32 %v883, 0.0
  %v949 = vmax.f32 %v887, 0.0
  %v950 = vmax.f32 %v889, 0.0
  %v951 = vmax.f32 %v893, 0.0
  %v952 = vmax.f32 %v895, 0.0
  %v953 = vmax.f32 %v899, 0.0
  %v954 = vmax.f32 %v901, 0.0
  %v955 = vmax.f32 %v905, 0.0
  %v956 = vmax.f32 %v907, 0.0
  %v957 = vmax.f32 %v911, 0.0
  %v958 = vmax.f32 %v913, 0.0
  %v959 = vmax.f32 %v917, 0.0
  %v960 = vmax.f32 %v919, 0.0
  %v961 = vmax.f32 %v923, 0.0
  %v962 = vmax.f32 %v925, 0.0
  %v963 = vmax.f32 %v929, 0.0
  %v964 = vmax.f32 %v931, 0.0
  %s965 = scalar_lea.vmem %s0, 384
  %v966 = vld [vmem:[%s965] sm:$0xff]
  %v967 = vld [vmem:[%s965 + $0x8] sm:$0xff]
  %v968 = vld [vmem:[%s965 + $0x10] sm:$0xff]
  %v969 = vld [vmem:[%s965 + $0x18] sm:$0xff]
  %v970 = vld [vmem:[%s965 + $0x20] sm:$0xff]
  %v971 = vld [vmem:[%s965 + $0x28] sm:$0xff]
  %v972 = vld [vmem:[%s965 + $0x30] sm:$0xff]
  %v973 = vld [vmem:[%s965 + $0x38] sm:$0xff]
  %v974 = vld [vmem:[%s965 + $0x40] sm:$0xff]
  %v975 = vld [vmem:[%s965 + $0x48] sm:$0xff]
  %v976 = vld [vmem:[%s965 + $0x50] sm:$0xff]
  %v977 = vld [vmem:[%s965 + $0x58] sm:$0xff]
  %v978 = vld [vmem:[%s965 + $0x60] sm:$0xff]
  %v979 = vld [vmem:[%s965 + $0x68] sm:$0xff]
  %v980 = vld [vmem:[%s965 + $0x70] sm:$0xff]
  %v981 = vld [vmem:[%s965 + $0x78] sm:$0xff]
  %s982 = scalar_lea.vmem %s1, 384
  %v983 = vld [vmem:[%s982] sm:$0xff]
  %v984 = vld [vmem:[%s982 + $0x8] sm:$0xff]
  %v985 = vld [vmem:[%s982 + $0x10] sm:$0xff]
  %v986 = vld [vmem:[%s982 + $0x18] sm:$0xff]
  %v987 = vld [vmem:[%s982 + $0x20] sm:$0xff]
  %v988 = vld [vmem:[%s982 + $0x28] sm:$0xff]
  %v989 = vld [vmem:[%s982 + $0x30] sm:$0xff]
  %v990 = vld [vmem:[%s982 + $0x38] sm:$0xff]
  %v991 = vld [vmem:[%s982 + $0x40] sm:$0xff]
  %v992 = vld [vmem:[%s982 + $0x48] sm:$0xff]
  %v993 = vld [vmem:[%s982 + $0x50] sm:$0xff]
  %v994 = vld [vmem:[%s982 + $0x58] sm:$0xff]
  %v995 = vld [vmem:[%s982 + $0x60] sm:$0xff]
  %v996 = vld [vmem:[%s982 + $0x68] sm:$0xff]
  %v997 = vld [vmem:[%s982 + $0x70] sm:$0xff]
  %v998 = vld [vmem:[%s982 + $0x78] sm:$0xff]
  %1000 = vset.pattern.permute.xlu0 0
  %1001 = vperm.xlu0 %1000, %v983
  %v1002 = vpop.permute.xlu0 %1001
  %1005 = vset.pattern.permute.xlu0 0
  %1006 = vperm.xlu0 %1005, %v984
  %v1007 = vpop.permute.xlu0 %1006
  %1010 = vset.pattern.permute.xlu0 0
  %1011 = vperm.xlu0 %1010, %v985
  %v1012 = vpop.permute.xlu0 %1011
  %1015 = vset.pattern.permute.xlu0 0
  %1016 = vperm.xlu0 %1015, %v986
  %v1017 = vpop.permute.xlu0 %1016
  %1020 = vset.pattern.permute.xlu0 0
  %1021 = vperm.xlu0 %1020, %v987
  %v1022 = vpop.permute.xlu0 %1021
  %1025 = vset.pattern.permute.xlu0 0
  %1026 = vperm.xlu0 %1025, %v988
  %v1027 = vpop.permute.xlu0 %1026
  %1030 = vset.pattern.permute.xlu0 0
  %1031 = vperm.xlu0 %1030, %v989
  %v1032 = vpop.permute.xlu0 %1031
  %1035 = vset.pattern.permute.xlu0 0
  %1036 = vperm.xlu0 %1035, %v990
  %v1037 = vpop.permute.xlu0 %1036
  %1040 = vset.pattern.permute.xlu0 0
  %1041 = vperm.xlu0 %1040, %v991
  %v1042 = vpop.permute.xlu0 %1041
  %1045 = vset.pattern.permute.xlu0 0
  %1046 = vperm.xlu0 %1045, %v992
  %v1047 = vpop.permute.xlu0 %1046
  %1050 = vset.pattern.permute.xlu0 0
  %1051 = vperm.xlu0 %1050, %v993
  %v1052 = vpop.permute.xlu0 %1051
  %1055 = vset.pattern.permute.xlu0 0
  %1056 = vperm.xlu0 %1055, %v994
  %v1057 = vpop.permute.xlu0 %1056
  %1060 = vset.pattern.permute.xlu0 0
  %1061 = vperm.xlu0 %1060, %v995
  %v1062 = vpop.permute.xlu0 %1061
  %1065 = vset.pattern.permute.xlu0 0
  %1066 = vperm.xlu0 %1065, %v996
  %v1067 = vpop.permute.xlu0 %1066
  %1070 = vset.pattern.permute.xlu0 0
  %1071 = vperm.xlu0 %1070, %v997
  %v1072 = vpop.permute.xlu0 %1071
  %1075 = vset.pattern.permute.xlu0 0
  %1076 = vperm.xlu0 %1075, %v998
  %v1077 = vpop.permute.xlu0 %1076
  %1079 = vmatprep.subr.mxu0 %v964
  %1080 = vmatpush1.msra.mxu0 %v963
  %1081 = vmatprep.subr.mxu0 %v962
  %1082 = vmatpush1.msra.mxu0 %v961
  %1083 = vmatprep.subr.mxu0 %v960
  %1084 = vmatpush1.msra.mxu0 %v959
  %1085 = vmatprep.subr.mxu0 %v958
  %1086 = vmatpush1.msra.mxu0 %v957
  %1087 = vmatprep.subr.mxu0 %v956
  %1088 = vmatpush1.msra.mxu0 %v955
  %1089 = vmatprep.subr.mxu0 %v954
  %1090 = vmatpush1.msra.mxu0 %v953
  %1091 = vmatprep.subr.mxu0 %v952
  %1092 = vmatpush1.msra.mxu0 %v951
  %1093 = vmatprep.subr.mxu0 %v950
  %1094 = vmatpush1.msra.mxu0 %v949
  %1095 = vmatprep.subr.mxu0 %v948
  %1096 = vmatpush1.msra.mxu0 %v947
  %1097 = vmatprep.subr.mxu0 %v946
  %1098 = vmatpush1.msra.mxu0 %v945
  %1099 = vmatprep.subr.mxu0 %v944
  %1100 = vmatpush1.msra.mxu0 %v943
  %1101 = vmatprep.subr.mxu0 %v942
  %1102 = vmatpush1.msra.mxu0 %v941
  %1103 = vmatprep.subr.mxu0 %v940
  %1104 = vmatpush1.msra.mxu0 %v939
  %1105 = vmatprep.subr.mxu0 %v938
  %1106 = vmatpush1.msra.mxu0 %v937
  %1107 = vmatprep.subr.mxu0 %v936
  %1108 = vmatpush1.msra.mxu0 %v935
  %1109 = vmatprep.subr.mxu0 %v934
  %1110 = vmatpush1.msra.mxu0 %v933
  %1111 = vmatprep.subr.mxu0 0.0
  %1112 = vmatpush2.msra.mxu0 0.0
  %1113 = vmatprep.subr.mxu0 0.0
  %1114 = vmatpush2.msra.mxu0 0.0
  %1115 = vmatprep.subr.mxu0 0.0
  %1116 = vmatpush2.msra.mxu0 0.0
  %1117 = vmatprep.subr.mxu0 0.0
  %1118 = vmatpush2.msra.mxu0 0.0
  %1119 = vmatprep.subr.mxu0 0.0
  %1120 = vmatpush2.msra.mxu0 0.0
  %1121 = vmatprep.subr.mxu0 0.0
  %1122 = vmatpush2.msra.mxu0 0.0
  %1123 = vmatprep.subr.mxu0 0.0
  %1124 = vmatpush2.msra.mxu0 0.0
  %1125 = vmatprep.subr.mxu0 0.0
  %1126 = vmatpush2.msra.mxu0 0.0
  %1127 = vmatprep.subr.mxu0 0.0
  %1128 = vmatpush2.msra.mxu0 0.0
  %1129 = vmatprep.subr.mxu0 0.0
  %1130 = vmatpush2.msra.mxu0 0.0
  %1131 = vmatprep.subr.mxu0 0.0
  %1132 = vmatpush2.msra.mxu0 0.0
  %1133 = vmatprep.subr.mxu0 0.0
  %1134 = vmatpush2.msra.mxu0 0.0
  %1135 = vmatprep.subr.mxu0 0.0
  %1136 = vmatpush2.msra.mxu0 0.0
  %1137 = vmatprep.subr.mxu0 0.0
  %1138 = vmatpush2.msra.mxu0 0.0
  %1139 = vmatprep.subr.mxu0 0.0
  %1140 = vmatpush2.msra.mxu0 0.0
  %1141 = vmatprep.subr.mxu0 0.0
  %1142 = vmatpush2.msra.mxu0 0.0
  %1143 = vmatprep.mubr.f32.mxu0 0.0
  %1144 = vmatmul.mubr.f32.gmra.mxu0 %v966
  %v1145 = vpop.f32.mrf.mxu0
  %v1146 = vadd.f32 %v1002, %v1145
  %v1147 = vpop.f32.mrf.mxu0
  %v1148 = vadd.f32 %v1002, %v1147
  %1149 = vmatprep.mubr.f32.mxu0 0.0
  %1150 = vmatmul.mubr.f32.gmra.mxu0 %v967
  %v1151 = vpop.f32.mrf.mxu0
  %v1152 = vadd.f32 %v1007, %v1151
  %v1153 = vpop.f32.mrf.mxu0
  %v1154 = vadd.f32 %v1007, %v1153
  %1155 = vmatprep.mubr.f32.mxu0 0.0
  %1156 = vmatmul.mubr.f32.gmra.mxu0 %v968
  %v1157 = vpop.f32.mrf.mxu0
  %v1158 = vadd.f32 %v1012, %v1157
  %v1159 = vpop.f32.mrf.mxu0
  %v1160 = vadd.f32 %v1012, %v1159
  %1161 = vmatprep.mubr.f32.mxu0 0.0
  %1162 = vmatmul.mubr.f32.gmra.mxu0 %v969
  %v1163 = vpop.f32.mrf.mxu0
  %v1164 = vadd.f32 %v1017, %v1163
  %v1165 = vpop.f32.mrf.mxu0
  %v1166 = vadd.f32 %v1017, %v1165
  %1167 = vmatprep.mubr.f32.mxu0 0.0
  %1168 = vmatmul.mubr.f32.gmra.mxu0 %v970
  %v1169 = vpop.f32.mrf.mxu0
  %v1170 = vadd.f32 %v1022, %v1169
  %v1171 = vpop.f32.mrf.mxu0
  %v1172 = vadd.f32 %v1022, %v1171
  %1173 = vmatprep.mubr.f32.mxu0 0.0
  %1174 = vmatmul.mubr.f32.gmra.mxu0 %v971
  %v1175 = vpop.f32.mrf.mxu0
  %v1176 = vadd.f32 %v1027, %v1175
  %v1177 = vpop.f32.mrf.mxu0
  %v1178 = vadd.f32 %v1027, %v1177
  %1179 = vmatprep.mubr.f32.mxu0 0.0
  %1180 = vmatmul.mubr.f32.gmra.mxu0 %v972
  %v1181 = vpop.f32.mrf.mxu0
  %v1182 = vadd.f32 %v1032, %v1181
  %v1183 = vpop.f32.mrf.mxu0
  %v1184 = vadd.f32 %v1032, %v1183
  %1185 = vmatprep.mubr.f32.mxu0 0.0
  %1186 = vmatmul.mubr.f32.gmra.mxu0 %v973
  %v1187 = vpop.f32.mrf.mxu0
  %v1188 = vadd.f32 %v1037, %v1187
  %v1189 = vpop.f32.mrf.mxu0
  %v1190 = vadd.f32 %v1037, %v1189
  %1191 = vmatprep.mubr.f32.mxu0 0.0
  %1192 = vmatmul.mubr.f32.gmra.mxu0 %v974
  %v1193 = vpop.f32.mrf.mxu0
  %v1194 = vadd.f32 %v1042, %v1193
  %v1195 = vpop.f32.mrf.mxu0
  %v1196 = vadd.f32 %v1042, %v1195
  %1197 = vmatprep.mubr.f32.mxu0 0.0
  %1198 = vmatmul.mubr.f32.gmra.mxu0 %v975
  %v1199 = vpop.f32.mrf.mxu0
  %v1200 = vadd.f32 %v1047, %v1199
  %v1201 = vpop.f32.mrf.mxu0
  %v1202 = vadd.f32 %v1047, %v1201
  %1203 = vmatprep.mubr.f32.mxu0 0.0
  %1204 = vmatmul.mubr.f32.gmra.mxu0 %v976
  %v1205 = vpop.f32.mrf.mxu0
  %v1206 = vadd.f32 %v1052, %v1205
  %v1207 = vpop.f32.mrf.mxu0
  %v1208 = vadd.f32 %v1052, %v1207
  %1209 = vmatprep.mubr.f32.mxu0 0.0
  %1210 = vmatmul.mubr.f32.gmra.mxu0 %v977
  %v1211 = vpop.f32.mrf.mxu0
  %v1212 = vadd.f32 %v1057, %v1211
  %v1213 = vpop.f32.mrf.mxu0
  %v1214 = vadd.f32 %v1057, %v1213
  %1215 = vmatprep.mubr.f32.mxu0 0.0
  %1216 = vmatmul.mubr.f32.gmra.mxu0 %v978
  %v1217 = vpop.f32.mrf.mxu0
  %v1218 = vadd.f32 %v1062, %v1217
  %v1219 = vpop.f32.mrf.mxu0
  %v1220 = vadd.f32 %v1062, %v1219
  %1221 = vmatprep.mubr.f32.mxu0 0.0
  %1222 = vmatmul.mubr.f32.gmra.mxu0 %v979
  %v1223 = vpop.f32.mrf.mxu0
  %v1224 = vadd.f32 %v1067, %v1223
  %v1225 = vpop.f32.mrf.mxu0
  %v1226 = vadd.f32 %v1067, %v1225
  %1227 = vmatprep.mubr.f32.mxu0 0.0
  %1228 = vmatmul.mubr.f32.gmra.mxu0 %v980
  %v1229 = vpop.f32.mrf.mxu0
  %v1230 = vadd.f32 %v1072, %v1229
  %v1231 = vpop.f32.mrf.mxu0
  %v1232 = vadd.f32 %v1072, %v1231
  %1233 = vmatprep.mubr.f32.mxu0 0.0
  %1234 = vmatmul.mubr.f32.gmra.mxu0 %v981
  %v1235 = vpop.f32.mrf.mxu0
  %v1236 = vadd.f32 %v1077, %v1235
  %v1237 = vpop.f32.mrf.mxu0
  %v1238 = vadd.f32 %v1077, %v1237
  %1239 = vdwg.mxu0
  %v1240 = vmax.f32 %v1146, 0.0
  %v1241 = vmax.f32 %v1148, 0.0
  %v1242 = vmax.f32 %v1152, 0.0
  %v1243 = vmax.f32 %v1154, 0.0
  %v1244 = vmax.f32 %v1158, 0.0
  %v1245 = vmax.f32 %v1160, 0.0
  %v1246 = vmax.f32 %v1164, 0.0
  %v1247 = vmax.f32 %v1166, 0.0
  %v1248 = vmax.f32 %v1170, 0.0
  %v1249 = vmax.f32 %v1172, 0.0
  %v1250 = vmax.f32 %v1176, 0.0
  %v1251 = vmax.f32 %v1178, 0.0
  %v1252 = vmax.f32 %v1182, 0.0
  %v1253 = vmax.f32 %v1184, 0.0
  %v1254 = vmax.f32 %v1188, 0.0
  %v1255 = vmax.f32 %v1190, 0.0
  %v1256 = vmax.f32 %v1194, 0.0
  %v1257 = vmax.f32 %v1196, 0.0
  %v1258 = vmax.f32 %v1200, 0.0
  %v1259 = vmax.f32 %v1202, 0.0
  %v1260 = vmax.f32 %v1206, 0.0
  %v1261 = vmax.f32 %v1208, 0.0
  %v1262 = vmax.f32 %v1212, 0.0
  %v1263 = vmax.f32 %v1214, 0.0
  %v1264 = vmax.f32 %v1218, 0.0
  %v1265 = vmax.f32 %v1220, 0.0
  %v1266 = vmax.f32 %v1224, 0.0
  %v1267 = vmax.f32 %v1226, 0.0
  %v1268 = vmax.f32 %v1230, 0.0
  %v1269 = vmax.f32 %v1232, 0.0
  %v1270 = vmax.f32 %v1236, 0.0
  %v1271 = vmax.f32 %v1238, 0.0
  %s1272 = scalar_lea.vmem %s0, 512
  %v1273 = vld [vmem:[%s1272] sm:$0xff]
  %v1274 = vld [vmem:[%s1272 + $0x8] sm:$0xff]
  %v1275 = vld [vmem:[%s1272 + $0x10] sm:$0xff]
  %v1276 = vld [vmem:[%s1272 + $0x18] sm:$0xff]
  %v1277 = vld [vmem:[%s1272 + $0x20] sm:$0xff]
  %v1278 = vld [vmem:[%s1272 + $0x28] sm:$0xff]
  %v1279 = vld [vmem:[%s1272 + $0x30] sm:$0xff]
  %v1280 = vld [vmem:[%s1272 + $0x38] sm:$0xff]
  %v1281 = vld [vmem:[%s1272 + $0x40] sm:$0xff]
  %v1282 = vld [vmem:[%s1272 + $0x48] sm:$0xff]
  %v1283 = vld [vmem:[%s1272 + $0x50] sm:$0xff]
  %v1284 = vld [vmem:[%s1272 + $0x58] sm:$0xff]
  %v1285 = vld [vmem:[%s1272 + $0x60] sm:$0xff]
  %v1286 = vld [vmem:[%s1272 + $0x68] sm:$0xff]
  %v1287 = vld [vmem:[%s1272 + $0x70] sm:$0xff]
  %v1288 = vld [vmem:[%s1272 + $0x78] sm:$0xff]
  %s1289 = scalar_lea.vmem %s1, 512
  %v1290 = vld [vmem:[%s1289] sm:$0xff]
  %v1291 = vld [vmem:[%s1289 + $0x8] sm:$0xff]
  %v1292 = vld [vmem:[%s1289 + $0x10] sm:$0xff]
  %v1293 = vld [vmem:[%s1289 + $0x18] sm:$0xff]
  %v1294 = vld [vmem:[%s1289 + $0x20] sm:$0xff]
  %v1295 = vld [vmem:[%s1289 + $0x28] sm:$0xff]
  %v1296 = vld [vmem:[%s1289 + $0x30] sm:$0xff]
  %v1297 = vld [vmem:[%s1289 + $0x38] sm:$0xff]
  %v1298 = vld [vmem:[%s1289 + $0x40] sm:$0xff]
  %v1299 = vld [vmem:[%s1289 + $0x48] sm:$0xff]
  %v1300 = vld [vmem:[%s1289 + $0x50] sm:$0xff]
  %v1301 = vld [vmem:[%s1289 + $0x58] sm:$0xff]
  %v1302 = vld [vmem:[%s1289 + $0x60] sm:$0xff]
  %v1303 = vld [vmem:[%s1289 + $0x68] sm:$0xff]
  %v1304 = vld [vmem:[%s1289 + $0x70] sm:$0xff]
  %v1305 = vld [vmem:[%s1289 + $0x78] sm:$0xff]
  %1307 = vset.pattern.permute.xlu0 0
  %1308 = vperm.xlu0 %1307, %v1290
  %v1309 = vpop.permute.xlu0 %1308
  %1312 = vset.pattern.permute.xlu0 0
  %1313 = vperm.xlu0 %1312, %v1291
  %v1314 = vpop.permute.xlu0 %1313
  %1316 = vset.pattern.permute.xlu0 0
  %1317 = vperm.xlu0 %1316, %v1292
  %v1318 = vpop.permute.xlu0 %1317
  %1320 = vset.pattern.permute.xlu0 0
  %1321 = vperm.xlu0 %1320, %v1293
  %v1322 = vpop.permute.xlu0 %1321
  %1324 = vset.pattern.permute.xlu0 0
  %1325 = vperm.xlu0 %1324, %v1294
  %v1326 = vpop.permute.xlu0 %1325
  %1328 = vset.pattern.permute.xlu0 0
  %1329 = vperm.xlu0 %1328, %v1295
  %v1330 = vpop.permute.xlu0 %1329
  %1332 = vset.pattern.permute.xlu0 0
  %1333 = vperm.xlu0 %1332, %v1296
  %v1334 = vpop.permute.xlu0 %1333
  %1336 = vset.pattern.permute.xlu0 0
  %1337 = vperm.xlu0 %1336, %v1297
  %v1338 = vpop.permute.xlu0 %1337
  %1340 = vset.pattern.permute.xlu0 0
  %1341 = vperm.xlu0 %1340, %v1298
  %v1342 = vpop.permute.xlu0 %1341
  %1344 = vset.pattern.permute.xlu0 0
  %1345 = vperm.xlu0 %1344, %v1299
  %v1346 = vpop.permute.xlu0 %1345
  %1348 = vset.pattern.permute.xlu0 0
  %1349 = vperm.xlu0 %1348, %v1300
  %v1350 = vpop.permute.xlu0 %1349
  %1352 = vset.pattern.permute.xlu0 0
  %1353 = vperm.xlu0 %1352, %v1301
  %v1354 = vpop.permute.xlu0 %1353
  %1356 = vset.pattern.permute.xlu0 0
  %1357 = vperm.xlu0 %1356, %v1302
  %v1358 = vpop.permute.xlu0 %1357
  %1360 = vset.pattern.permute.xlu0 0
  %1361 = vperm.xlu0 %1360, %v1303
  %v1362 = vpop.permute.xlu0 %1361
  %1364 = vset.pattern.permute.xlu0 0
  %1365 = vperm.xlu0 %1364, %v1304
  %v1366 = vpop.permute.xlu0 %1365
  %1368 = vset.pattern.permute.xlu0 0
  %1369 = vperm.xlu0 %1368, %v1305
  %v1370 = vpop.permute.xlu0 %1369
  %1371 = vmatprep.subr.mxu0 %v1271
  %1372 = vmatpush1.msra.mxu0 %v1270
  %1373 = vmatprep.subr.mxu0 %v1269
  %1374 = vmatpush1.msra.mxu0 %v1268
  %1375 = vmatprep.subr.mxu0 %v1267
  %1376 = vmatpush1.msra.mxu0 %v1266
  %1377 = vmatprep.subr.mxu0 %v1265
  %1378 = vmatpush1.msra.mxu0 %v1264
  %1379 = vmatprep.subr.mxu0 %v1263
  %1380 = vmatpush1.msra.mxu0 %v1262
  %1381 = vmatprep.subr.mxu0 %v1261
  %1382 = vmatpush1.msra.mxu0 %v1260
  %1383 = vmatprep.subr.mxu0 %v1259
  %1384 = vmatpush1.msra.mxu0 %v1258
  %1385 = vmatprep.subr.mxu0 %v1257
  %1386 = vmatpush1.msra.mxu0 %v1256
  %1387 = vmatprep.subr.mxu0 %v1255
  %1388 = vmatpush1.msra.mxu0 %v1254
  %1389 = vmatprep.subr.mxu0 %v1253
  %1390 = vmatpush1.msra.mxu0 %v1252
  %1391 = vmatprep.subr.mxu0 %v1251
  %1392 = vmatpush1.msra.mxu0 %v1250
  %1393 = vmatprep.subr.mxu0 %v1249
  %1394 = vmatpush1.msra.mxu0 %v1248
  %1395 = vmatprep.subr.mxu0 %v1247
  %1396 = vmatpush1.msra.mxu0 %v1246
  %1397 = vmatprep.subr.mxu0 %v1245
  %1398 = vmatpush1.msra.mxu0 %v1244
  %1399 = vmatprep.subr.mxu0 %v1243
  %1400 = vmatpush1.msra.mxu0 %v1242
  %1401 = vmatprep.subr.mxu0 %v1241
  %1402 = vmatpush1.msra.mxu0 %v1240
  %1403 = vmatprep.subr.mxu0 0.0
  %1404 = vmatpush2.msra.mxu0 0.0
  %1405 = vmatprep.subr.mxu0 0.0
  %1406 = vmatpush2.msra.mxu0 0.0
  %1407 = vmatprep.subr.mxu0 0.0
  %1408 = vmatpush2.msra.mxu0 0.0
  %1409 = vmatprep.subr.mxu0 0.0
  %1410 = vmatpush2.msra.mxu0 0.0
  %1411 = vmatprep.subr.mxu0 0.0
  %1412 = vmatpush2.msra.mxu0 0.0
  %1413 = vmatprep.subr.mxu0 0.0
  %1414 = vmatpush2.msra.mxu0 0.0
  %1415 = vmatprep.subr.mxu0 0.0
  %1416 = vmatpush2.msra.mxu0 0.0
  %1417 = vmatprep.subr.mxu0 0.0
  %1418 = vmatpush2.msra.mxu0 0.0
  %1419 = vmatprep.subr.mxu0 0.0
  %1420 = vmatpush2.msra.mxu0 0.0
  %1421 = vmatprep.subr.mxu0 0.0
  %1422 = vmatpush2.msra.mxu0 0.0
  %1423 = vmatprep.subr.mxu0 0.0
  %1424 = vmatpush2.msra.mxu0 0.0
  %1425 = vmatprep.subr.mxu0 0.0
  %1426 = vmatpush2.msra.mxu0 0.0
  %1427 = vmatprep.subr.mxu0 0.0
  %1428 = vmatpush2.msra.mxu0 0.0
  %1429 = vmatprep.subr.mxu0 0.0
  %1430 = vmatpush2.msra.mxu0 0.0
  %1431 = vmatprep.subr.mxu0 0.0
  %1432 = vmatpush2.msra.mxu0 0.0
  %1433 = vmatprep.subr.mxu0 0.0
  %1434 = vmatpush2.msra.mxu0 0.0
  %1435 = vmatprep.mubr.f32.mxu0 0.0
  %1436 = vmatmul.mubr.f32.gmra.mxu0 %v1273
  %v1437 = vpop.f32.mrf.mxu0
  %v1438 = vadd.f32 %v1309, %v1437
  %v1439 = vpop.f32.mrf.mxu0
  %v1440 = vadd.f32 %v1309, %v1439
  %1441 = vmatprep.mubr.f32.mxu0 0.0
  %1442 = vmatmul.mubr.f32.gmra.mxu0 %v1274
  %v1443 = vpop.f32.mrf.mxu0
  %v1444 = vpop.f32.mrf.mxu0
  %1445 = vmatprep.mubr.f32.mxu0 0.0
  %1446 = vmatmul.mubr.f32.gmra.mxu0 %v1275
  %v1447 = vpop.f32.mrf.mxu0
  %v1448 = vpop.f32.mrf.mxu0
  %1449 = vmatprep.mubr.f32.mxu0 0.0
  %1450 = vmatmul.mubr.f32.gmra.mxu0 %v1276
  %v1451 = vpop.f32.mrf.mxu0
  %v1452 = vpop.f32.mrf.mxu0
  %1453 = vmatprep.mubr.f32.mxu0 0.0
  %1454 = vmatmul.mubr.f32.gmra.mxu0 %v1277
  %v1455 = vpop.f32.mrf.mxu0
  %v1456 = vpop.f32.mrf.mxu0
  %1457 = vmatprep.mubr.f32.mxu0 0.0
  %1458 = vmatmul.mubr.f32.gmra.mxu0 %v1278
  %v1459 = vpop.f32.mrf.mxu0
  %v1460 = vpop.f32.mrf.mxu0
  %1461 = vmatprep.mubr.f32.mxu0 0.0
  %1462 = vmatmul.mubr.f32.gmra.mxu0 %v1279
  %v1463 = vpop.f32.mrf.mxu0
  %v1464 = vpop.f32.mrf.mxu0
  %1465 = vmatprep.mubr.f32.mxu0 0.0
  %1466 = vmatmul.mubr.f32.gmra.mxu0 %v1280
  %v1467 = vpop.f32.mrf.mxu0
  %v1468 = vpop.f32.mrf.mxu0
  %1469 = vmatprep.mubr.f32.mxu0 0.0
  %1470 = vmatmul.mubr.f32.gmra.mxu0 %v1281
  %v1471 = vpop.f32.mrf.mxu0
  %v1472 = vpop.f32.mrf.mxu0
  %1473 = vmatprep.mubr.f32.mxu0 0.0
  %1474 = vmatmul.mubr.f32.gmra.mxu0 %v1282
  %v1475 = vpop.f32.mrf.mxu0
  %v1476 = vpop.f32.mrf.mxu0
  %1477 = vmatprep.mubr.f32.mxu0 0.0
  %1478 = vmatmul.mubr.f32.gmra.mxu0 %v1283
  %v1479 = vpop.f32.mrf.mxu0
  %v1480 = vpop.f32.mrf.mxu0
  %1481 = vmatprep.mubr.f32.mxu0 0.0
  %1482 = vmatmul.mubr.f32.gmra.mxu0 %v1284
  %v1483 = vpop.f32.mrf.mxu0
  %v1484 = vpop.f32.mrf.mxu0
  %1485 = vmatprep.mubr.f32.mxu0 0.0
  %1486 = vmatmul.mubr.f32.gmra.mxu0 %v1285
  %v1487 = vpop.f32.mrf.mxu0
  %v1488 = vpop.f32.mrf.mxu0
  %1489 = vmatprep.mubr.f32.mxu0 0.0
  %1490 = vmatmul.mubr.f32.gmra.mxu0 %v1286
  %v1491 = vpop.f32.mrf.mxu0
  %v1492 = vpop.f32.mrf.mxu0
  %1493 = vmatprep.mubr.f32.mxu0 0.0
  %1494 = vmatmul.mubr.f32.gmra.mxu0 %v1287
  %v1495 = vpop.f32.mrf.mxu0
  %v1496 = vpop.f32.mrf.mxu0
  %1497 = vmatprep.mubr.f32.mxu0 0.0
  %1498 = vmatmul.mubr.f32.gmra.mxu0 %v1288
  %v1499 = vpop.f32.mrf.mxu0
  %v1500 = vpop.f32.mrf.mxu0
  %1501 = vdwg.mxu0
  %v1502 = vsub.f32 0.0, %v1438
  %v1503 = vsub.f32 0.0, %v1440
  %v1504 = vmul.f32 %v1502, 1.442695
  %v1505 = vpow.pop %v1504
  %v1506 = vmul.f32 %v1503, 1.442695
  %v1507 = vpow.pop %v1506
  %v1508 = vadd.f32 %v1505, 1.0
  %v1509 = vadd.f32 %v1507, 1.0
  %v1510 = vrcp.pop %v1508
  %v1511 = vrcp.pop %v1509
  %v1514 = vcombine.low %v1510, %v1511
  %v1516 = vunpack.c.l.s4 1966171168
  %v1517 = vunpack.c.0.s8 %v1516
  %v1518 = vlaneseq
  %v1519 = vshrl.u32 %v1518, 7
  %v1520 = vsub.s32 %v1517, %v1519
  %v1521 = vrot.slane %v1514, %v1520
  %v1523 = vunpack.c.l.s4 1966171168
  %v1524 = vunpack.c.0.s8 %v1523
  %v1525 = vlaneseq
  %v1526 = vshrl.u32 %v1525, 7
  %v1527 = vsub.s32 %v1524, %v1526
  %v1528 = vrot.slane %v1521, %v1527
  %v1530 = vlaneseq
  %vm1531 = vcmp.ge.s32.totalorder %v1530, 0
  %vm1532 = vcmp.lt.s32.totalorder %v1530, 256
  %vm1533 = vmand %vm1531, %vm1532
  %1534 = vst.msk [vmem:[%s3] sm:$0x3] %vm1533, %v1528
  // Predicated region
  $region14: #{fullnet_forward.1} parent=0 // pred_check
    _
  $region15: #{fullnet_forward.1} parent=0 // pred_check_branch
    %1536 = sbr.rel (0) target = $region17
  $region16: #{fullnet_forward.1} parent=0 // pred_region
    _
  $region17: #{fullnet_forward.1} parent=0 // pred_fallthru
    _
  // Predicated region
  $region18: #{fullnet_forward.1} parent=0 // pred_check
    _
  $region19: #{fullnet_forward.1} parent=0 // pred_check_branch
    %1538 = sbr.rel (0) target = $region21
  $region20: #{fullnet_forward.1} parent=0 // pred_region
    _
  $region21: #{fullnet_forward.1} parent=0 // pred_fallthru
    _

</llo_original>
